<compile_context>
chip_gen: v5e
topology: v5e:2x2
jax: 0.10.0
libtpu: 0.0.40
codegen_flags: <defaults>
</compile_context>

<pallas_src>
import functools
import math

import jax
import jax.numpy as jnp
from jax import lax
from jax.experimental import pallas as pl
from jax.experimental.pallas import tpu as pltpu


# ---------------------------------------------------------------------------
# Kernel: one (batch tile, layer) step.  Residual stream carried across the
# layer axis in a VMEM scratch; output written only after the last layer.
# ---------------------------------------------------------------------------
def _encoder_stack_kernel(
    x_ref, pos_ref,
    wqk_ref, bqk_ref, wv_ref, wo_ref,
    w1_ref, b1_ref, w2_ref, small_ref,
    out_ref,
    src_scr,                     # VMEM (Bt, S, D) f32 — residual stream, persists over layers
    ctx_scr,                     # VMEM (Bt, S, D) f32 — per-layer merged attention context
    *, nhead: int, kv_blk: int,
):
    l = pl.program_id(1)

    # First layer for this batch tile: pull src into the resident scratch.
    @pl.when(l == 0)
    def _():
        src_scr[...] = x_ref[...].astype(jnp.float32)

    x = src_scr[...]                                 # (Bt, S, D) f32
    Bt, S, D = x.shape
    hd = D // nhead

    p = pos_ref[...].astype(jnp.float32)             # (Bt, S, D)

    # Packed small per-layer params: rows = [bv, bo, ln1w, ln1b, ln2w, ln2b, b2, pad]
    sm = small_ref[0]                                # (8, D) f32
    bv, bo = sm[0:1, :], sm[1:2, :]
    ln1w, ln1b = sm[2:3, :], sm[3:4, :]
    ln2w, ln2b = sm[4:5, :], sm[5:6, :]
    b2 = sm[6:7, :]

    # ---- projections on the flattened (Bt*S, D) slab ------------------------
    x2 = x.reshape(Bt * S, D)
    qk_in = (x + p).reshape(Bt * S, D).astype(jnp.bfloat16)
    x_bf = x2.astype(jnp.bfloat16)

    # Fused Q|K projection (1/sqrt(hd) already folded into the Q half) + V.
    qk = jnp.dot(qk_in, wqk_ref[0],
                 preferred_element_type=jnp.float32) + bqk_ref[0]       # (Bt*S, 2D)
    v = jnp.dot(x_bf, wv_ref[0],
                preferred_element_type=jnp.float32) + bv                # (Bt*S, D)

    n_kv = S // kv_blk

    # ---- attention: heads unrolled (lane slices), flash-style KV tiling -----
    for h in range(nhead):
        qh = qk[:, h * hd:(h + 1) * hd].reshape(Bt, S, hd).astype(jnp.bfloat16)
        kh = qk[:, D + h * hd: D + (h + 1) * hd].reshape(Bt, S, hd).astype(jnp.bfloat16)
        vh = v[:, h * hd:(h + 1) * hd].reshape(Bt, S, hd).astype(jnp.bfloat16)

        if n_kv == 1:
            s = jnp.einsum("bqd,bkd->bqk", qh, kh,
                           preferred_element_type=jnp.float32)          # (Bt, S, S)
            m = jnp.max(s, axis=-1, keepdims=True)
            e = jnp.exp(s - m)
            denom = jnp.sum(e, axis=-1, keepdims=True)
            acc = jnp.einsum("bqk,bkd->bqd", e.astype(jnp.bfloat16), vh,
                             preferred_element_type=jnp.float32)        # (Bt, S, hd)
        else:
            m = jnp.full((Bt, S, 1), -jnp.inf, jnp.float32)
            denom = jnp.zeros((Bt, S, 1), jnp.float32)
            acc = jnp.zeros((Bt, S, hd), jnp.float32)
            for t in range(n_kv):
                kt = kh[:, t * kv_blk:(t + 1) * kv_blk, :]
                vt = vh[:, t * kv_blk:(t + 1) * kv_blk, :]
                s = jnp.einsum("bqd,bkd->bqk", qh, kt,
                               preferred_element_type=jnp.float32)      # (Bt, S, kv_blk)
                m_new = jnp.maximum(m, jnp.max(s, axis=-1, keepdims=True))
                a = jnp.exp(m - m_new)
                e = jnp.exp(s - m_new)
                denom = a * denom + jnp.sum(e, axis=-1, keepdims=True)
                acc = a * acc + jnp.einsum("bqk,bkd->bqd",
                                           e.astype(jnp.bfloat16), vt,
                                           preferred_element_type=jnp.float32)
                m = m_new

        # Deferred normalization: one multiply on (S, hd), written straight
        # into the lane slice of the merged ctx buffer (no stack/concat).
        ctx_scr[:, :, h * hd:(h + 1) * hd] = acc * pl.reciprocal(denom, approx=True)

    # Single full-width output projection + bias.
    ctx = ctx_scr[...].reshape(Bt * S, D).astype(jnp.bfloat16)
    attn_out = jnp.dot(ctx, wo_ref[0],
                       preferred_element_type=jnp.float32) + bo          # (Bt*S, D)

    # ---- residual + LayerNorm1 (eps=1e-5, biased variance; PyTorch default) -
    h1 = x2 + attn_out
    mu1 = jnp.mean(h1, axis=-1, keepdims=True)
    var1 = jnp.mean((h1 - mu1) ** 2, axis=-1, keepdims=True)
    h1n = (h1 - mu1) * lax.rsqrt(var1 + 1e-5) * ln1w + ln1b

    # ---- FFN: linear1 -> ReLU -> linear2 (dropout = identity in eval) -------
    f = jnp.dot(h1n.astype(jnp.bfloat16), w1_ref[0],
                preferred_element_type=jnp.float32) + b1_ref[0]          # (Bt*S, F)
    f = jnp.maximum(f, 0.0)
    f = jnp.dot(f.astype(jnp.bfloat16), w2_ref[0],
                preferred_element_type=jnp.float32) + b2                 # (Bt*S, D)

    # ---- residual + LayerNorm2 ----------------------------------------------
    h2 = h1n + f
    mu2 = jnp.mean(h2, axis=-1, keepdims=True)
    var2 = jnp.mean((h2 - mu2) ** 2, axis=-1, keepdims=True)
    out = (h2 - mu2) * lax.rsqrt(var2 + 1e-5) * ln2w + ln2b

    # Keep src resident for the next layer; write HBM only after the last one.
    src_scr[...] = out.reshape(Bt, S, D)

    @pl.when(l == pl.num_programs(1) - 1)
    def _():
        out_ref[...] = out.reshape(Bt, S, D).astype(out_ref.dtype)


# ---------------------------------------------------------------------------
# Wrapper-side layout plumbing.
# ---------------------------------------------------------------------------
def _prepare_stacked_params(layer_params, nhead):
    """PyTorch-layout per-layer params -> stacked, pre-transposed bf16 weights."""
    D = layer_params[0]["wqkv"].shape[1]
    hd = D // nhead
    scale = 1.0 / math.sqrt(hd)

    def per_layer(p):
        wq_t = p["wqkv"][:D, :].T * scale                    # scale folded into Q
        wk_t = p["wqkv"][D:2 * D, :].T
        wqk_t = jnp.concatenate([wq_t, wk_t], axis=1).astype(jnp.bfloat16)   # (D, 2D)
        bqk = jnp.concatenate([p["bqkv"][:, :D] * scale,
                               p["bqkv"][:, D:2 * D]], axis=1)               # (1, 2D)
        small = jnp.concatenate([
            p["bqkv"][:, 2 * D:], p["bo"], p["ln1w"], p["ln1b"],
            p["ln2w"], p["ln2b"], p["b2"],
            jnp.zeros((1, D), jnp.float32)], axis=0)                          # (8, D)
        return {
            "wqk_t": wqk_t,
            "bqk": bqk,
            "wv_t": p["wqkv"][2 * D:, :].T.astype(jnp.bfloat16),              # (D, D)
            "wo_t": p["wo"].T.astype(jnp.bfloat16),                           # (D, D)
            "w1_t": p["w1"].T.astype(jnp.bfloat16),                           # (D, F)
            "b1":   p["b1"],                                                  # (1, F)
            "w2_t": p["w2"].T.astype(jnp.bfloat16),                           # (F, D)
            "small": small,
        }

    per = [per_layer(p) for p in layer_params]
    return {k: jnp.stack([q[k] for q in per], axis=0) for k in per[0]}


def _largest_divisor_leq(n, cap):
    cap = max(1, min(n, cap))
    for d in range(cap, 0, -1):
        if n % d == 0:
            return d
    return n


def _pick_batch_tile(B, S, D, F, kv_blk, budget_bytes=20 << 20):
    """Largest divisor of B whose per-tile f32 activation footprint fits the budget."""
    per_b = 4 * S * (12 * D + 2 * F + 2 * kv_blk)     # rough working-set estimate
    bt = 1
    for cand in range(1, B + 1):
        if B % cand == 0 and cand * per_b <= budget_bytes:
            bt = cand
    return bt


def transformer_encoder_pallas(src, pos, layer_params, *, nhead, final_norm=None,
                               batch_tile=None, max_kv_block=512):
    """TransformerEncoder.forward. src, pos: (B, S, D). final_norm: None or (w, b)."""
    B, S, D = src.shape
    L = len(layer_params)
    F = layer_params[0]["w1"].shape[0]
    assert D % nhead == 0, "d_model must be divisible by nhead"

    params = _prepare_stacked_params(layer_params, nhead)

    kv_blk = _largest_divisor_leq(S, max_kv_block)
    Bt = batch_tile if batch_tile is not None else _pick_batch_tile(B, S, D, F, kv_blk)
    assert B % Bt == 0

    def wspec(shape):  # layer-indexed weight block (streamed along the layer axis)
        return pl.BlockSpec((1,) + shape, lambda b, l: (l, 0, 0))

    in_specs = [
        pl.BlockSpec((Bt, S, D), lambda b, l: (b, 0, 0)),   # src
        pl.BlockSpec((Bt, S, D), lambda b, l: (b, 0, 0)),   # pos
        wspec((D, 2 * D)),    # wqk_t
        wspec((1, 2 * D)),    # bqk
        wspec((D, D)),        # wv_t
        wspec((D, D)),        # wo_t
        wspec((D, F)),        # w1_t
        wspec((1, F)),        # b1
        wspec((F, D)),        # w2_t
        wspec((8, D)),        # packed small params
    ]

    kernel = functools.partial(_encoder_stack_kernel, nhead=nhead, kv_blk=kv_blk)
    out = pl.pallas_call(
        kernel,
        out_shape=jax.ShapeDtypeStruct((B, S, D), src.dtype),
        grid_spec=pltpu.PrefetchScalarGridSpec(
            num_scalar_prefetch=0,
            grid=(B // Bt, L),               # layer axis innermost (carried state)
            in_specs=in_specs,
            out_specs=pl.BlockSpec((Bt, S, D), lambda b, l: (b, 0, 0)),
            scratch_shapes=[
                pltpu.VMEM((Bt, S, D), jnp.float32),   # residual stream
                pltpu.VMEM((Bt, S, D), jnp.float32),   # merged attention ctx
            ],
        ),
        compiler_params=pltpu.CompilerParams(
            dimension_semantics=("parallel", "arbitrary"),
            # 48 MiB fits every generation (v7x physical VMEM = 64 MiB); the
            # Bt / kv_blk pickers keep the activation working set well inside.
            vmem_limit_bytes=48 * 1024 * 1024,
        ),
    )(
        src, pos,
        params["wqk_t"], params["bqk"], params["wv_t"], params["wo_t"],
        params["w1_t"], params["b1"], params["w2_t"], params["small"],
    )

    if final_norm is not None:               # TransformerEncoder.norm (None by default)
        w, b = final_norm
        out = _layer_norm(out, w, b)
    return out


# ---------------------------------------------------------------------------
# Pure-JAX reference (f32, PyTorch conventions) for correctness checking.
# ---------------------------------------------------------------------------
def _layer_norm(x, w, b, eps=1e-5):
    mu = jnp.mean(x, axis=-1, keepdims=True)
    var = jnp.mean((x - mu) ** 2, axis=-1, keepdims=True)
    return (x - mu) * lax.rsqrt(var + eps) * w + b


def _encoder_layer_ref(x, pos, p, nhead):
    B, S, D = x.shape
    hd = D // nhead
    qk_in = x + pos
    wqkv, bqkv = p["wqkv"], p["bqkv"][0]
    wq, wk, wv = wqkv[:D], wqkv[D:2 * D], wqkv[2 * D:]
    bq, bk, bv = bqkv[:D], bqkv[D:2 * D], bqkv[2 * D:]
    q = qk_in @ wq.T + bq
    k = qk_in @ wk.T + bk
    v = x @ wv.T + bv
    q = q.reshape(B, S, nhead, hd).transpose(0, 2, 1, 3)
    k = k.reshape(B, S, nhead, hd).transpose(0, 2, 1, 3)
    v = v.reshape(B, S, nhead, hd).transpose(0, 2, 1, 3)
    s = jnp.einsum("bhqd,bhkd->bhqk", q, k) / math.sqrt(hd)
    a = jax.nn.softmax(s, axis=-1)
    ctx = jnp.einsum("bhqk,bhkd->bhqd", a, v).transpose(0, 2, 1, 3).reshape(B, S, D)
    attn_out = ctx @ p["wo"].T + p["bo"][0]
    h1n = _layer_norm(x + attn_out, p["ln1w"][0], p["ln1b"][0])
    f = jnp.maximum(h1n @ p["w1"].T + p["b1"][0], 0.0) @ p["w2"].T + p["b2"][0]
    return _layer_norm(h1n + f, p["ln2w"][0], p["ln2b"][0])


def transformer_encoder_ref(src, pos, layer_params, *, nhead, final_norm=None):
    out = src
    for p in layer_params:
        out = _encoder_layer_ref(out, pos, p, nhead)
    if final_norm is not None:
        w, b = final_norm
        out = _layer_norm(out, w, b)
    return out


def _init_layer_params(key, d_model, dim_feedforward):
    ks = jax.random.split(key, 6)
    s = 0.02
    return {
        "wqkv": s * jax.random.normal(ks[0], (3 * d_model, d_model), jnp.float32),
        "bqkv": jnp.zeros((1, 3 * d_model), jnp.float32),
        "wo":   s * jax.random.normal(ks[1], (d_model, d_model), jnp.float32),
        "bo":   jnp.zeros((1, d_model), jnp.float32),
        "ln1w": jnp.ones((1, d_model), jnp.float32),
        "ln1b": jnp.zeros((1, d_model), jnp.float32),
        "ln2w": jnp.ones((1, d_model), jnp.float32),
        "ln2b": jnp.zeros((1, d_model), jnp.float32),
        "w1":   s * jax.random.normal(ks[2], (dim_feedforward, d_model), jnp.float32),
        "b1":   jnp.zeros((1, dim_feedforward), jnp.float32),
        "w2":   s * jax.random.normal(ks[3], (d_model, dim_feedforward), jnp.float32),
        "b2":   jnp.zeros((1, d_model), jnp.float32),
    }


if __name__ == "__main__":
    # Small shapes: batch=2, seq=8, d_model=32, nhead=4, ffn=64, layers=2.
    B, S, D = 2, 8, 32
    NHEAD, FFN, NUM_LAYERS = 4, 64, 2

    key = jax.random.PRNGKey(0)
    k_src, k_pos, *k_layers = jax.random.split(key, 2 + NUM_LAYERS)

    src = jax.random.normal(k_src, (B, S, D), jnp.float32)
    pos = jax.random.normal(k_pos, (B, S, D), jnp.float32)
    layer_params = [_init_layer_params(k, D, FFN) for k in k_layers]

    # mask / src_key_padding_mask are None in this configuration.
    out = transformer_encoder_pallas(src, pos, layer_params, nhead=NHEAD, final_norm=None)
    out = jax.block_until_ready(out)

    ref = transformer_encoder_ref(src, pos, layer_params, nhead=NHEAD, final_norm=None)
    assert out.shape == (B, S, D)
    assert bool(jnp.all(jnp.isfinite(out)))
    max_err = float(jnp.max(jnp.abs(out - ref)))
    assert max_err < 5e-2, f"mismatch vs f32 reference: max abs err {max_err}"
    print("KERNEL_OK")
</pallas_src>

<mosaic_0001>
module attributes {stable_mosaic.version = 11 : i64} {
  func.func @_encoder_stack_kernel(%arg0: i32, %arg1: i32, %arg2: memref<2x8x32xf32, #tpu.memory_space<vmem>>, %arg3: memref<2x8x32xf32, #tpu.memory_space<vmem>>, %arg4: memref<1x32x64xbf16, #tpu.memory_space<vmem>>, %arg5: memref<1x1x64xf32, #tpu.memory_space<vmem>>, %arg6: memref<1x32x32xbf16, #tpu.memory_space<vmem>>, %arg7: memref<1x32x32xbf16, #tpu.memory_space<vmem>>, %arg8: memref<1x32x64xbf16, #tpu.memory_space<vmem>>, %arg9: memref<1x1x64xf32, #tpu.memory_space<vmem>>, %arg10: memref<1x64x32xbf16, #tpu.memory_space<vmem>>, %arg11: memref<1x8x32xf32, #tpu.memory_space<vmem>>, %arg12: memref<2x8x32xf32, #tpu.memory_space<vmem>>, %arg13: memref<2x8x32xf32, #tpu.memory_space<vmem>>, %arg14: memref<2x8x32xf32, #tpu.memory_space<vmem>>) attributes {dimension_semantics = [#tpu.dimension_semantics<parallel>, #tpu.dimension_semantics<arbitrary>], iteration_bounds = array<i64: 1, 2>, scalar_prefetch = 0 : i64, scratch_operands = 2 : i64, tpu.core_type = #tpu.core_type<tc>, window_params = [{transform_indices = @transform_0, window_bounds = array<i64: 2, 8, 32>}, {transform_indices = @transform_1, window_bounds = array<i64: 2, 8, 32>}, {transform_indices = @transform_2, window_bounds = array<i64: 1, 32, 64>}, {transform_indices = @transform_3, window_bounds = array<i64: 1, 1, 64>}, {transform_indices = @transform_4, window_bounds = array<i64: 1, 32, 32>}, {transform_indices = @transform_5, window_bounds = array<i64: 1, 32, 32>}, {transform_indices = @transform_6, window_bounds = array<i64: 1, 32, 64>}, {transform_indices = @transform_7, window_bounds = array<i64: 1, 1, 64>}, {transform_indices = @transform_8, window_bounds = array<i64: 1, 64, 32>}, {transform_indices = @transform_9, window_bounds = array<i64: 1, 8, 32>}, {transform_indices = @transform_10, window_bounds = array<i64: 2, 8, 32>}]} {
    %c0_i32 = arith.constant 0 : i32
    %0 = arith.cmpi eq, %arg1, %c0_i32 : i32
    %1 = arith.extui %0 : i1 to i32
    %c0_i32_0 = arith.constant 0 : i32
    %2 = arith.cmpi ne, %1, %c0_i32_0 : i32
    scf.if %2 {
      %c0_77 = arith.constant 0 : index
      %c0_78 = arith.constant 0 : index
      %c0_79 = arith.constant 0 : index
      %198 = vector.load %arg2[%c0_77, %c0_78, %c0_79] : memref<2x8x32xf32, #tpu.memory_space<vmem>>, vector<2x8x32xf32>
      %c0_80 = arith.constant 0 : index
      %c0_81 = arith.constant 0 : index
      %c0_82 = arith.constant 0 : index
      %199 = vector.load %arg13[%c0_80, %c0_81, %c0_82] : memref<2x8x32xf32, #tpu.memory_space<vmem>>, vector<2x8x32xf32>
      tpu.vector_store %arg13[%c0_80, %c0_81, %c0_82], %198 {strides = array<i32>} : memref<2x8x32xf32, #tpu.memory_space<vmem>>, vector<2x8x32xf32>,
    } else {
    }
    %c0 = arith.constant 0 : index
    %c0_1 = arith.constant 0 : index
    %c0_2 = arith.constant 0 : index
    %3 = vector.load %arg13[%c0, %c0_1, %c0_2] : memref<2x8x32xf32, #tpu.memory_space<vmem>>, vector<2x8x32xf32>
    %c0_3 = arith.constant 0 : index
    %c0_4 = arith.constant 0 : index
    %c0_5 = arith.constant 0 : index
    %4 = vector.load %arg3[%c0_3, %c0_4, %c0_5] : memref<2x8x32xf32, #tpu.memory_space<vmem>>, vector<2x8x32xf32>
    %c0_6 = arith.constant 0 : index
    %c0_7 = arith.constant 0 : index
    %c0_8 = arith.constant 0 : index
    %5 = vector.load %arg11[%c0_6, %c0_7, %c0_8] : memref<1x8x32xf32, #tpu.memory_space<vmem>>, vector<1x8x32xf32>
    %6 = vector.shape_cast %5 : vector<1x8x32xf32> to vector<8x32xf32>
    %7 = vector.extract_strided_slice %6 {offsets = [0, 0], sizes = [1, 32], strides = [1, 1]} : vector<8x32xf32> to vector<1x32xf32>
    %8 = vector.extract_strided_slice %6 {offsets = [1, 0], sizes = [1, 32], strides = [1, 1]} : vector<8x32xf32> to vector<1x32xf32>
    %9 = vector.extract_strided_slice %6 {offsets = [2, 0], sizes = [1, 32], strides = [1, 1]} : vector<8x32xf32> to vector<1x32xf32>
    %10 = vector.extract_strided_slice %6 {offsets = [3, 0], sizes = [1, 32], strides = [1, 1]} : vector<8x32xf32> to vector<1x32xf32>
    %11 = vector.extract_strided_slice %6 {offsets = [4, 0], sizes = [1, 32], strides = [1, 1]} : vector<8x32xf32> to vector<1x32xf32>
    %12 = vector.extract_strided_slice %6 {offsets = [5, 0], sizes = [1, 32], strides = [1, 1]} : vector<8x32xf32> to vector<1x32xf32>
    %13 = vector.extract_strided_slice %6 {offsets = [6, 0], sizes = [1, 32], strides = [1, 1]} : vector<8x32xf32> to vector<1x32xf32>
    %14 = vector.shape_cast %3 : vector<2x8x32xf32> to vector<16x32xf32>
    %15 = arith.addf %3, %4 : vector<2x8x32xf32>
    %16 = vector.shape_cast %15 : vector<2x8x32xf32> to vector<16x32xf32>
    %17 = arith.truncf %16 : vector<16x32xf32> to vector<16x32xbf16>
    %18 = arith.truncf %14 : vector<16x32xf32> to vector<16x32xbf16>
    %c0_9 = arith.constant 0 : index
    %c0_10 = arith.constant 0 : index
    %c0_11 = arith.constant 0 : index
    %19 = vector.load %arg4[%c0_9, %c0_10, %c0_11] : memref<1x32x64xbf16, #tpu.memory_space<vmem>>, vector<1x32x64xbf16>
    %20 = vector.shape_cast %19 : vector<1x32x64xbf16> to vector<32x64xbf16>
    %cst = arith.constant dense<0.000000e+00> : vector<16x64xf32>
    %21 = tpu.matmul %17, %20, %cst {dimension_numbers = #tpu.dot_dimension_numbers<[1], [0], [0], [1], [0, 0, 1, 1], [], []>} : vector<16x32xbf16>, vector<32x64xbf16>, vector<16x64xf32> -> vector<16x64xf32>
    %c0_12 = arith.constant 0 : index
    %c0_13 = arith.constant 0 : index
    %c0_14 = arith.constant 0 : index
    %22 = vector.load %arg5[%c0_12, %c0_13, %c0_14] : memref<1x1x64xf32, #tpu.memory_space<vmem>>, vector<1x1x64xf32>
    %23 = vector.shape_cast %22 : vector<1x1x64xf32> to vector<1x64xf32>
    %24 = vector.broadcast %23 : vector<1x64xf32> to vector<16x64xf32>
    %25 = arith.addf %21, %24 : vector<16x64xf32>
    %c0_15 = arith.constant 0 : index
    %c0_16 = arith.constant 0 : index
    %c0_17 = arith.constant 0 : index
    %26 = vector.load %arg6[%c0_15, %c0_16, %c0_17] : memref<1x32x32xbf16, #tpu.memory_space<vmem>>, vector<1x32x32xbf16>
    %27 = vector.shape_cast %26 : vector<1x32x32xbf16> to vector<32x32xbf16>
    %cst_18 = arith.constant dense<0.000000e+00> : vector<16x32xf32>
    %28 = tpu.matmul %18, %27, %cst_18 {dimension_numbers = #tpu.dot_dimension_numbers<[1], [0], [0], [1], [0, 0, 1, 1], [], []>} : vector<16x32xbf16>, vector<32x32xbf16>, vector<16x32xf32> -> vector<16x32xf32>
    %29 = vector.broadcast %7 : vector<1x32xf32> to vector<16x32xf32>
    %30 = arith.addf %28, %29 : vector<16x32xf32>
    %31 = vector.extract_strided_slice %25 {offsets = [0, 0], sizes = [16, 8], strides = [1, 1]} : vector<16x64xf32> to vector<16x8xf32>
    %32 = vector.shape_cast %31 : vector<16x8xf32> to vector<2x8x8xf32>
    %33 = arith.truncf %32 : vector<2x8x8xf32> to vector<2x8x8xbf16>
    %34 = vector.extract_strided_slice %25 {offsets = [0, 32], sizes = [16, 8], strides = [1, 1]} : vector<16x64xf32> to vector<16x8xf32>
    %35 = vector.shape_cast %34 : vector<16x8xf32> to vector<2x8x8xf32>
    %36 = arith.truncf %35 : vector<2x8x8xf32> to vector<2x8x8xbf16>
    %37 = vector.extract_strided_slice %30 {offsets = [0, 0], sizes = [16, 8], strides = [1, 1]} : vector<16x32xf32> to vector<16x8xf32>
    %38 = vector.shape_cast %37 : vector<16x8xf32> to vector<2x8x8xf32>
    %39 = arith.truncf %38 : vector<2x8x8xf32> to vector<2x8x8xbf16>
    "tpu.trace_start"() <{level = 10 : i32, message = "bqd,bkd->bqk"}> : () -> ()
    %cst_19 = arith.constant dense<0.000000e+00> : vector<2x8x8xf32>
    %40 = tpu.matmul %33, %36, %cst_19 {dimension_numbers = #tpu.dot_dimension_numbers<[2], [2], [1], [1], [0, 0, 0, 1, 1, 1], [0], [0]>} : vector<2x8x8xbf16>, vector<2x8x8xbf16>, vector<2x8x8xf32> -> vector<2x8x8xf32>
    "tpu.trace_stop"() : () -> ()
    %cst_20 = arith.constant dense<0xFF800000> : vector<2x8xf32>
    %41 = vector.multi_reduction <maximumf>, %40, %cst_20 [2] : vector<2x8x8xf32> to vector<2x8xf32>
    %42 = vector.shape_cast %41 : vector<2x8xf32> to vector<2x8x1xf32>
    %43 = vector.broadcast %42 : vector<2x8x1xf32> to vector<2x8x8xf32>
    %44 = arith.subf %40, %43 : vector<2x8x8xf32>
    %45 = math.exp %44 : vector<2x8x8xf32>
    %cst_21 = arith.constant dense<0.000000e+00> : vector<2x8xf32>
    %46 = vector.multi_reduction <add>, %45, %cst_21 [2] : vector<2x8x8xf32> to vector<2x8xf32>
    %47 = vector.shape_cast %46 : vector<2x8xf32> to vector<2x8x1xf32>
    %48 = arith.truncf %45 : vector<2x8x8xf32> to vector<2x8x8xbf16>
    "tpu.trace_start"() <{level = 10 : i32, message = "bqk,bkd->bqd"}> : () -> ()
    %cst_22 = arith.constant dense<0.000000e+00> : vector<2x8x8xf32>
    %49 = tpu.matmul %48, %39, %cst_22 {dimension_numbers = #tpu.dot_dimension_numbers<[2], [1], [1], [2], [0, 0, 0, 1, 1, 2], [0], [0]>} : vector<2x8x8xbf16>, vector<2x8x8xbf16>, vector<2x8x8xf32> -> vector<2x8x8xf32>
    "tpu.trace_stop"() : () -> ()
    %50 = tpu.reciprocal %47 {approx = true} : vector<2x8x1xf32> -> vector<2x8x1xf32>
    %51 = vector.broadcast %50 : vector<2x8x1xf32> to vector<2x8x8xf32>
    %52 = arith.mulf %49, %51 : vector<2x8x8xf32>
    %c0_23 = arith.constant 0 : index
    %c0_24 = arith.constant 0 : index
    %c0_25 = arith.constant 0 : index
    %53 = vector.load %arg14[%c0_23, %c0_24, %c0_25] : memref<2x8x32xf32, #tpu.memory_space<vmem>>, vector<2x8x8xf32>
    tpu.vector_store %arg14[%c0_23, %c0_24, %c0_25], %52 {strides = array<i32>} : memref<2x8x32xf32, #tpu.memory_space<vmem>>, vector<2x8x8xf32>,
    %54 = vector.extract_strided_slice %25 {offsets = [0, 8], sizes = [16, 8], strides = [1, 1]} : vector<16x64xf32> to vector<16x8xf32>
    %55 = vector.shape_cast %54 : vector<16x8xf32> to vector<2x8x8xf32>
    %56 = arith.truncf %55 : vector<2x8x8xf32> to vector<2x8x8xbf16>
    %57 = vector.extract_strided_slice %25 {offsets = [0, 40], sizes = [16, 8], strides = [1, 1]} : vector<16x64xf32> to vector<16x8xf32>
    %58 = vector.shape_cast %57 : vector<16x8xf32> to vector<2x8x8xf32>
    %59 = arith.truncf %58 : vector<2x8x8xf32> to vector<2x8x8xbf16>
    %60 = vector.extract_strided_slice %30 {offsets = [0, 8], sizes = [16, 8], strides = [1, 1]} : vector<16x32xf32> to vector<16x8xf32>
    %61 = vector.shape_cast %60 : vector<16x8xf32> to vector<2x8x8xf32>
    %62 = arith.truncf %61 : vector<2x8x8xf32> to vector<2x8x8xbf16>
    "tpu.trace_start"() <{level = 10 : i32, message = "bqd,bkd->bqk"}> : () -> ()
    %cst_26 = arith.constant dense<0.000000e+00> : vector<2x8x8xf32>
    %63 = tpu.matmul %56, %59, %cst_26 {dimension_numbers = #tpu.dot_dimension_numbers<[2], [2], [1], [1], [0, 0, 0, 1, 1, 1], [0], [0]>} : vector<2x8x8xbf16>, vector<2x8x8xbf16>, vector<2x8x8xf32> -> vector<2x8x8xf32>
    "tpu.trace_stop"() : () -> ()
    %cst_27 = arith.constant dense<0xFF800000> : vector<2x8xf32>
    %64 = vector.multi_reduction <maximumf>, %63, %cst_27 [2] : vector<2x8x8xf32> to vector<2x8xf32>
    %65 = vector.shape_cast %64 : vector<2x8xf32> to vector<2x8x1xf32>
    %66 = vector.broadcast %65 : vector<2x8x1xf32> to vector<2x8x8xf32>
    %67 = arith.subf %63, %66 : vector<2x8x8xf32>
    %68 = math.exp %67 : vector<2x8x8xf32>
    %cst_28 = arith.constant dense<0.000000e+00> : vector<2x8xf32>
    %69 = vector.multi_reduction <add>, %68, %cst_28 [2] : vector<2x8x8xf32> to vector<2x8xf32>
    %70 = vector.shape_cast %69 : vector<2x8xf32> to vector<2x8x1xf32>
    %71 = arith.truncf %68 : vector<2x8x8xf32> to vector<2x8x8xbf16>
    "tpu.trace_start"() <{level = 10 : i32, message = "bqk,bkd->bqd"}> : () -> ()
    %cst_29 = arith.constant dense<0.000000e+00> : vector<2x8x8xf32>
    %72 = tpu.matmul %71, %62, %cst_29 {dimension_numbers = #tpu.dot_dimension_numbers<[2], [1], [1], [2], [0, 0, 0, 1, 1, 2], [0], [0]>} : vector<2x8x8xbf16>, vector<2x8x8xbf16>, vector<2x8x8xf32> -> vector<2x8x8xf32>
    "tpu.trace_stop"() : () -> ()
    %73 = tpu.reciprocal %70 {approx = true} : vector<2x8x1xf32> -> vector<2x8x1xf32>
    %74 = vector.broadcast %73 : vector<2x8x1xf32> to vector<2x8x8xf32>
    %75 = arith.mulf %72, %74 : vector<2x8x8xf32>
    %c0_30 = arith.constant 0 : index
    %c0_31 = arith.constant 0 : index
    %c8 = arith.constant 8 : index
    %76 = vector.load %arg14[%c0_30, %c0_31, %c8] : memref<2x8x32xf32, #tpu.memory_space<vmem>>, vector<2x8x8xf32>
    tpu.vector_store %arg14[%c0_30, %c0_31, %c8], %75 {strides = array<i32>} : memref<2x8x32xf32, #tpu.memory_space<vmem>>, vector<2x8x8xf32>,
    %77 = vector.extract_strided_slice %25 {offsets = [0, 16], sizes = [16, 8], strides = [1, 1]} : vector<16x64xf32> to vector<16x8xf32>
    %78 = vector.shape_cast %77 : vector<16x8xf32> to vector<2x8x8xf32>
    %79 = arith.truncf %78 : vector<2x8x8xf32> to vector<2x8x8xbf16>
    %80 = vector.extract_strided_slice %25 {offsets = [0, 48], sizes = [16, 8], strides = [1, 1]} : vector<16x64xf32> to vector<16x8xf32>
    %81 = vector.shape_cast %80 : vector<16x8xf32> to vector<2x8x8xf32>
    %82 = arith.truncf %81 : vector<2x8x8xf32> to vector<2x8x8xbf16>
    %83 = vector.extract_strided_slice %30 {offsets = [0, 16], sizes = [16, 8], strides = [1, 1]} : vector<16x32xf32> to vector<16x8xf32>
    %84 = vector.shape_cast %83 : vector<16x8xf32> to vector<2x8x8xf32>
    %85 = arith.truncf %84 : vector<2x8x8xf32> to vector<2x8x8xbf16>
    "tpu.trace_start"() <{level = 10 : i32, message = "bqd,bkd->bqk"}> : () -> ()
    %cst_32 = arith.constant dense<0.000000e+00> : vector<2x8x8xf32>
    %86 = tpu.matmul %79, %82, %cst_32 {dimension_numbers = #tpu.dot_dimension_numbers<[2], [2], [1], [1], [0, 0, 0, 1, 1, 1], [0], [0]>} : vector<2x8x8xbf16>, vector<2x8x8xbf16>, vector<2x8x8xf32> -> vector<2x8x8xf32>
    "tpu.trace_stop"() : () -> ()
    %cst_33 = arith.constant dense<0xFF800000> : vector<2x8xf32>
    %87 = vector.multi_reduction <maximumf>, %86, %cst_33 [2] : vector<2x8x8xf32> to vector<2x8xf32>
    %88 = vector.shape_cast %87 : vector<2x8xf32> to vector<2x8x1xf32>
    %89 = vector.broadcast %88 : vector<2x8x1xf32> to vector<2x8x8xf32>
    %90 = arith.subf %86, %89 : vector<2x8x8xf32>
    %91 = math.exp %90 : vector<2x8x8xf32>
    %cst_34 = arith.constant dense<0.000000e+00> : vector<2x8xf32>
    %92 = vector.multi_reduction <add>, %91, %cst_34 [2] : vector<2x8x8xf32> to vector<2x8xf32>
    %93 = vector.shape_cast %92 : vector<2x8xf32> to vector<2x8x1xf32>
    %94 = arith.truncf %91 : vector<2x8x8xf32> to vector<2x8x8xbf16>
    "tpu.trace_start"() <{level = 10 : i32, message = "bqk,bkd->bqd"}> : () -> ()
    %cst_35 = arith.constant dense<0.000000e+00> : vector<2x8x8xf32>
    %95 = tpu.matmul %94, %85, %cst_35 {dimension_numbers = #tpu.dot_dimension_numbers<[2], [1], [1], [2], [0, 0, 0, 1, 1, 2], [0], [0]>} : vector<2x8x8xbf16>, vector<2x8x8xbf16>, vector<2x8x8xf32> -> vector<2x8x8xf32>
    "tpu.trace_stop"() : () -> ()
    %96 = tpu.reciprocal %93 {approx = true} : vector<2x8x1xf32> -> vector<2x8x1xf32>
    %97 = vector.broadcast %96 : vector<2x8x1xf32> to vector<2x8x8xf32>
    %98 = arith.mulf %95, %97 : vector<2x8x8xf32>
    %c0_36 = arith.constant 0 : index
    %c0_37 = arith.constant 0 : index
    %c16 = arith.constant 16 : index
    %99 = vector.load %arg14[%c0_36, %c0_37, %c16] : memref<2x8x32xf32, #tpu.memory_space<vmem>>, vector<2x8x8xf32>
    tpu.vector_store %arg14[%c0_36, %c0_37, %c16], %98 {strides = array<i32>} : memref<2x8x32xf32, #tpu.memory_space<vmem>>, vector<2x8x8xf32>,
    %100 = vector.extract_strided_slice %25 {offsets = [0, 24], sizes = [16, 8], strides = [1, 1]} : vector<16x64xf32> to vector<16x8xf32>
    %101 = vector.shape_cast %100 : vector<16x8xf32> to vector<2x8x8xf32>
    %102 = arith.truncf %101 : vector<2x8x8xf32> to vector<2x8x8xbf16>
    %103 = vector.extract_strided_slice %25 {offsets = [0, 56], sizes = [16, 8], strides = [1, 1]} : vector<16x64xf32> to vector<16x8xf32>
    %104 = vector.shape_cast %103 : vector<16x8xf32> to vector<2x8x8xf32>
    %105 = arith.truncf %104 : vector<2x8x8xf32> to vector<2x8x8xbf16>
    %106 = vector.extract_strided_slice %30 {offsets = [0, 24], sizes = [16, 8], strides = [1, 1]} : vector<16x32xf32> to vector<16x8xf32>
    %107 = vector.shape_cast %106 : vector<16x8xf32> to vector<2x8x8xf32>
    %108 = arith.truncf %107 : vector<2x8x8xf32> to vector<2x8x8xbf16>
    "tpu.trace_start"() <{level = 10 : i32, message = "bqd,bkd->bqk"}> : () -> ()
    %cst_38 = arith.constant dense<0.000000e+00> : vector<2x8x8xf32>
    %109 = tpu.matmul %102, %105, %cst_38 {dimension_numbers = #tpu.dot_dimension_numbers<[2], [2], [1], [1], [0, 0, 0, 1, 1, 1], [0], [0]>} : vector<2x8x8xbf16>, vector<2x8x8xbf16>, vector<2x8x8xf32> -> vector<2x8x8xf32>
    "tpu.trace_stop"() : () -> ()
    %cst_39 = arith.constant dense<0xFF800000> : vector<2x8xf32>
    %110 = vector.multi_reduction <maximumf>, %109, %cst_39 [2] : vector<2x8x8xf32> to vector<2x8xf32>
    %111 = vector.shape_cast %110 : vector<2x8xf32> to vector<2x8x1xf32>
    %112 = vector.broadcast %111 : vector<2x8x1xf32> to vector<2x8x8xf32>
    %113 = arith.subf %109, %112 : vector<2x8x8xf32>
    %114 = math.exp %113 : vector<2x8x8xf32>
    %cst_40 = arith.constant dense<0.000000e+00> : vector<2x8xf32>
    %115 = vector.multi_reduction <add>, %114, %cst_40 [2] : vector<2x8x8xf32> to vector<2x8xf32>
    %116 = vector.shape_cast %115 : vector<2x8xf32> to vector<2x8x1xf32>
    %117 = arith.truncf %114 : vector<2x8x8xf32> to vector<2x8x8xbf16>
    "tpu.trace_start"() <{level = 10 : i32, message = "bqk,bkd->bqd"}> : () -> ()
    %cst_41 = arith.constant dense<0.000000e+00> : vector<2x8x8xf32>
    %118 = tpu.matmul %117, %108, %cst_41 {dimension_numbers = #tpu.dot_dimension_numbers<[2], [1], [1], [2], [0, 0, 0, 1, 1, 2], [0], [0]>} : vector<2x8x8xbf16>, vector<2x8x8xbf16>, vector<2x8x8xf32> -> vector<2x8x8xf32>
    "tpu.trace_stop"() : () -> ()
    %119 = tpu.reciprocal %116 {approx = true} : vector<2x8x1xf32> -> vector<2x8x1xf32>
    %120 = vector.broadcast %119 : vector<2x8x1xf32> to vector<2x8x8xf32>
    %121 = arith.mulf %118, %120 : vector<2x8x8xf32>
    %c0_42 = arith.constant 0 : index
    %c0_43 = arith.constant 0 : index
    %c24 = arith.constant 24 : index
    %122 = vector.load %arg14[%c0_42, %c0_43, %c24] : memref<2x8x32xf32, #tpu.memory_space<vmem>>, vector<2x8x8xf32>
    tpu.vector_store %arg14[%c0_42, %c0_43, %c24], %121 {strides = array<i32>} : memref<2x8x32xf32, #tpu.memory_space<vmem>>, vector<2x8x8xf32>,
    %c0_44 = arith.constant 0 : index
    %c0_45 = arith.constant 0 : index
    %c0_46 = arith.constant 0 : index
    %123 = vector.load %arg14[%c0_44, %c0_45, %c0_46] : memref<2x8x32xf32, #tpu.memory_space<vmem>>, vector<2x8x32xf32>
    %124 = vector.shape_cast %123 : vector<2x8x32xf32> to vector<16x32xf32>
    %125 = arith.truncf %124 : vector<16x32xf32> to vector<16x32xbf16>
    %c0_47 = arith.constant 0 : index
    %c0_48 = arith.constant 0 : index
    %c0_49 = arith.constant 0 : index
    %126 = vector.load %arg7[%c0_47, %c0_48, %c0_49] : memref<1x32x32xbf16, #tpu.memory_space<vmem>>, vector<1x32x32xbf16>
    %127 = vector.shape_cast %126 : vector<1x32x32xbf16> to vector<32x32xbf16>
    %cst_50 = arith.constant dense<0.000000e+00> : vector<16x32xf32>
    %128 = tpu.matmul %125, %127, %cst_50 {dimension_numbers = #tpu.dot_dimension_numbers<[1], [0], [0], [1], [0, 0, 1, 1], [], []>} : vector<16x32xbf16>, vector<32x32xbf16>, vector<16x32xf32> -> vector<16x32xf32>
    %129 = vector.broadcast %8 : vector<1x32xf32> to vector<16x32xf32>
    %130 = arith.addf %128, %129 : vector<16x32xf32>
    %131 = arith.addf %14, %130 : vector<16x32xf32>
    %cst_51 = arith.constant dense<0.000000e+00> : vector<16xf32>
    %132 = vector.multi_reduction <add>, %131, %cst_51 [1] : vector<16x32xf32> to vector<16xf32>
    %133 = vector.shape_cast %132 : vector<16xf32> to vector<16x1xf32>
    %cst_52 = arith.constant 3.200000e+01 : f32
    %134 = vector.broadcast %cst_52 : f32 to vector<16x1xf32>
    %135 = arith.divf %133, %134 : vector<16x1xf32>
    %136 = vector.broadcast %135 : vector<16x1xf32> to vector<16x32xf32>
    %137 = arith.subf %131, %136 : vector<16x32xf32>
    %138 = arith.mulf %137, %137 : vector<16x32xf32>
    %cst_53 = arith.constant dense<0.000000e+00> : vector<16xf32>
    %139 = vector.multi_reduction <add>, %138, %cst_53 [1] : vector<16x32xf32> to vector<16xf32>
    %140 = vector.shape_cast %139 : vector<16xf32> to vector<16x1xf32>
    %cst_54 = arith.constant 3.200000e+01 : f32
    %141 = vector.broadcast %cst_54 : f32 to vector<16x1xf32>
    %142 = arith.divf %140, %141 : vector<16x1xf32>
    %143 = vector.broadcast %135 : vector<16x1xf32> to vector<16x32xf32>
    %144 = arith.subf %131, %143 : vector<16x32xf32>
    %cst_55 = arith.constant 9.99999974E-6 : f32
    %145 = vector.broadcast %cst_55 : f32 to vector<16x1xf32>
    %146 = arith.addf %142, %145 : vector<16x1xf32>
    %147 = math.rsqrt %146 : vector<16x1xf32>
    %148 = vector.broadcast %147 : vector<16x1xf32> to vector<16x32xf32>
    %149 = arith.mulf %144, %148 : vector<16x32xf32>
    %150 = vector.broadcast %9 : vector<1x32xf32> to vector<16x32xf32>
    %151 = arith.mulf %149, %150 : vector<16x32xf32>
    %152 = vector.broadcast %10 : vector<1x32xf32> to vector<16x32xf32>
    %153 = arith.addf %151, %152 : vector<16x32xf32>
    %154 = arith.truncf %153 : vector<16x32xf32> to vector<16x32xbf16>
    %c0_56 = arith.constant 0 : index
    %c0_57 = arith.constant 0 : index
    %c0_58 = arith.constant 0 : index
    %155 = vector.load %arg8[%c0_56, %c0_57, %c0_58] : memref<1x32x64xbf16, #tpu.memory_space<vmem>>, vector<1x32x64xbf16>
    %156 = vector.shape_cast %155 : vector<1x32x64xbf16> to vector<32x64xbf16>
    %cst_59 = arith.constant dense<0.000000e+00> : vector<16x64xf32>
    %157 = tpu.matmul %154, %156, %cst_59 {dimension_numbers = #tpu.dot_dimension_numbers<[1], [0], [0], [1], [0, 0, 1, 1], [], []>} : vector<16x32xbf16>, vector<32x64xbf16>, vector<16x64xf32> -> vector<16x64xf32>
    %c0_60 = arith.constant 0 : index
    %c0_61 = arith.constant 0 : index
    %c0_62 = arith.constant 0 : index
    %158 = vector.load %arg9[%c0_60, %c0_61, %c0_62] : memref<1x1x64xf32, #tpu.memory_space<vmem>>, vector<1x1x64xf32>
    %159 = vector.shape_cast %158 : vector<1x1x64xf32> to vector<1x64xf32>
    %160 = vector.broadcast %159 : vector<1x64xf32> to vector<16x64xf32>
    %161 = arith.addf %157, %160 : vector<16x64xf32>
    %cst_63 = arith.constant 0.000000e+00 : f32
    %162 = vector.broadcast %cst_63 : f32 to vector<16x64xf32>
    %163 = arith.maximumf %161, %162 : vector<16x64xf32>
    %164 = arith.truncf %163 : vector<16x64xf32> to vector<16x64xbf16>
    %c0_64 = arith.constant 0 : index
    %c0_65 = arith.constant 0 : index
    %c0_66 = arith.constant 0 : index
    %165 = vector.load %arg10[%c0_64, %c0_65, %c0_66] : memref<1x64x32xbf16, #tpu.memory_space<vmem>>, vector<1x64x32xbf16>
    %166 = vector.shape_cast %165 : vector<1x64x32xbf16> to vector<64x32xbf16>
    %cst_67 = arith.constant dense<0.000000e+00> : vector<16x32xf32>
    %167 = tpu.matmul %164, %166, %cst_67 {dimension_numbers = #tpu.dot_dimension_numbers<[1], [0], [0], [1], [0, 0, 1, 1], [], []>} : vector<16x64xbf16>, vector<64x32xbf16>, vector<16x32xf32> -> vector<16x32xf32>
    %168 = vector.broadcast %13 : vector<1x32xf32> to vector<16x32xf32>
    %169 = arith.addf %167, %168 : vector<16x32xf32>
    %170 = arith.addf %153, %169 : vector<16x32xf32>
    %cst_68 = arith.constant dense<0.000000e+00> : vector<16xf32>
    %171 = vector.multi_reduction <add>, %170, %cst_68 [1] : vector<16x32xf32> to vector<16xf32>
    %172 = vector.shape_cast %171 : vector<16xf32> to vector<16x1xf32>
    %cst_69 = arith.constant 3.200000e+01 : f32
    %173 = vector.broadcast %cst_69 : f32 to vector<16x1xf32>
    %174 = arith.divf %172, %173 : vector<16x1xf32>
    %175 = vector.broadcast %174 : vector<16x1xf32> to vector<16x32xf32>
    %176 = arith.subf %170, %175 : vector<16x32xf32>
    %177 = arith.mulf %176, %176 : vector<16x32xf32>
    %cst_70 = arith.constant dense<0.000000e+00> : vector<16xf32>
    %178 = vector.multi_reduction <add>, %177, %cst_70 [1] : vector<16x32xf32> to vector<16xf32>
    %179 = vector.shape_cast %178 : vector<16xf32> to vector<16x1xf32>
    %cst_71 = arith.constant 3.200000e+01 : f32
    %180 = vector.broadcast %cst_71 : f32 to vector<16x1xf32>
    %181 = arith.divf %179, %180 : vector<16x1xf32>
    %182 = vector.broadcast %174 : vector<16x1xf32> to vector<16x32xf32>
    %183 = arith.subf %170, %182 : vector<16x32xf32>
    %cst_72 = arith.constant 9.99999974E-6 : f32
    %184 = vector.broadcast %cst_72 : f32 to vector<16x1xf32>
    %185 = arith.addf %181, %184 : vector<16x1xf32>
    %186 = math.rsqrt %185 : vector<16x1xf32>
    %187 = vector.broadcast %186 : vector<16x1xf32> to vector<16x32xf32>
    %188 = arith.mulf %183, %187 : vector<16x32xf32>
    %189 = vector.broadcast %11 : vector<1x32xf32> to vector<16x32xf32>
    %190 = arith.mulf %188, %189 : vector<16x32xf32>
    %191 = vector.broadcast %12 : vector<1x32xf32> to vector<16x32xf32>
    %192 = arith.addf %190, %191 : vector<16x32xf32>
    %193 = vector.shape_cast %192 : vector<16x32xf32> to vector<2x8x32xf32>
    %c0_73 = arith.constant 0 : index
    %c0_74 = arith.constant 0 : index
    %c0_75 = arith.constant 0 : index
    %194 = vector.load %arg13[%c0_73, %c0_74, %c0_75] : memref<2x8x32xf32, #tpu.memory_space<vmem>>, vector<2x8x32xf32>
    tpu.vector_store %arg13[%c0_73, %c0_74, %c0_75], %193 {strides = array<i32>} : memref<2x8x32xf32, #tpu.memory_space<vmem>>, vector<2x8x32xf32>,
    %c1_i32 = arith.constant 1 : i32
    %195 = arith.cmpi eq, %arg1, %c1_i32 : i32
    %196 = arith.extui %195 : i1 to i32
    %c0_i32_76 = arith.constant 0 : i32
    %197 = arith.cmpi ne, %196, %c0_i32_76 : i32
    scf.if %197 {
      %198 = vector.shape_cast %192 : vector<16x32xf32> to vector<2x8x32xf32>
      %c0_77 = arith.constant 0 : index
      %c0_78 = arith.constant 0 : index
      %c0_79 = arith.constant 0 : index
      %199 = vector.load %arg12[%c0_77, %c0_78, %c0_79] : memref<2x8x32xf32, #tpu.memory_space<vmem>>, vector<2x8x32xf32>
      tpu.vector_store %arg12[%c0_77, %c0_78, %c0_79], %198 {strides = array<i32>} : memref<2x8x32xf32, #tpu.memory_space<vmem>>, vector<2x8x32xf32>,
    } else {
    }
    return
  }
  func.func @transform_0(%arg0: i32, %arg1: i32) -> (i32, i32, i32) {
    %c0_i32 = arith.constant 0 : i32
    %c0_i32_0 = arith.constant 0 : i32
    %c0_i32_1 = arith.constant 0 : i32
    return %arg0, %c0_i32, %c0_i32_0 : i32, i32, i32
  }
  func.func @transform_1(%arg0: i32, %arg1: i32) -> (i32, i32, i32) {
    %c0_i32 = arith.constant 0 : i32
    %c0_i32_0 = arith.constant 0 : i32
    %c0_i32_1 = arith.constant 0 : i32
    return %arg0, %c0_i32, %c0_i32_0 : i32, i32, i32
  }
  func.func @transform_2(%arg0: i32, %arg1: i32) -> (i32, i32, i32) {
    %c0_i32 = arith.constant 0 : i32
    %c0_i32_0 = arith.constant 0 : i32
    %c0_i32_1 = arith.constant 0 : i32
    return %arg1, %c0_i32, %c0_i32_0 : i32, i32, i32
  }
  func.func @transform_3(%arg0: i32, %arg1: i32) -> (i32, i32, i32) {
    %c0_i32 = arith.constant 0 : i32
    %c0_i32_0 = arith.constant 0 : i32
    %c0_i32_1 = arith.constant 0 : i32
    return %arg1, %c0_i32, %c0_i32_0 : i32, i32, i32
  }
  func.func @transform_4(%arg0: i32, %arg1: i32) -> (i32, i32, i32) {
    %c0_i32 = arith.constant 0 : i32
    %c0_i32_0 = arith.constant 0 : i32
    %c0_i32_1 = arith.constant 0 : i32
    return %arg1, %c0_i32, %c0_i32_0 : i32, i32, i32
  }
  func.func @transform_5(%arg0: i32, %arg1: i32) -> (i32, i32, i32) {
    %c0_i32 = arith.constant 0 : i32
    %c0_i32_0 = arith.constant 0 : i32
    %c0_i32_1 = arith.constant 0 : i32
    return %arg1, %c0_i32, %c0_i32_0 : i32, i32, i32
  }
  func.func @transform_6(%arg0: i32, %arg1: i32) -> (i32, i32, i32) {
    %c0_i32 = arith.constant 0 : i32
    %c0_i32_0 = arith.constant 0 : i32
    %c0_i32_1 = arith.constant 0 : i32
    return %arg1, %c0_i32, %c0_i32_0 : i32, i32, i32
  }
  func.func @transform_7(%arg0: i32, %arg1: i32) -> (i32, i32, i32) {
    %c0_i32 = arith.constant 0 : i32
    %c0_i32_0 = arith.constant 0 : i32
    %c0_i32_1 = arith.constant 0 : i32
    return %arg1, %c0_i32, %c0_i32_0 : i32, i32, i32
  }
  func.func @transform_8(%arg0: i32, %arg1: i32) -> (i32, i32, i32) {
    %c0_i32 = arith.constant 0 : i32
    %c0_i32_0 = arith.constant 0 : i32
    %c0_i32_1 = arith.constant 0 : i32
    return %arg1, %c0_i32, %c0_i32_0 : i32, i32, i32
  }
  func.func @transform_9(%arg0: i32, %arg1: i32) -> (i32, i32, i32) {
    %c0_i32 = arith.constant 0 : i32
    %c0_i32_0 = arith.constant 0 : i32
    %c0_i32_1 = arith.constant 0 : i32
    return %arg1, %c0_i32, %c0_i32_0 : i32, i32, i32
  }
  func.func @transform_10(%arg0: i32, %arg1: i32) -> (i32, i32, i32) {
    %c0_i32 = arith.constant 0 : i32
    %c0_i32_0 = arith.constant 0 : i32
    %c0_i32_1 = arith.constant 0 : i32
    return %arg0, %c0_i32, %c0_i32_0 : i32, i32, i32
  }
}

</mosaic_0001>

<llo_original>
// kernel: tpu_custom_call.1
$region0: #{tpu_custom_call.1}
  #allocation0 [shape = 'u32[]', space=smem, size = 0x4, offset = 0x4, fixed_abs, tag = 'smem constant byte address 0x4 - core index']
  #allocation1 [shape = 'u32[72,128]{1,0:T(1,128)}', space=vmem, size = 0x9000, scoped, tag = 'internal scratch']
  #allocation2 [shape = 'f32[2,8,32]{2,1,0:T(8,128)}', space=vmem, size = 0x2000, scoped, tag = 'scratch operand']
  #allocation3 [shape = 'f32[2,8,32]{2,1,0:T(8,128)}', space=vmem, size = 0x2000, scoped, tag = 'scratch operand']
  %s0 = inlined_call_operand.hbm [shape: f32[2,8,32], index: 0, kind: input, shape index: {}]
  %s1 = inlined_call_operand.hbm [shape: f32[2,8,32], index: 1, kind: input, shape index: {}]
  %s2 = inlined_call_operand.vmem [shape: bf16[2,32,64], index: 2, kind: input, shape index: {}]
  %s3 = inlined_call_operand.hbm [shape: f32[2,1,64], index: 3, kind: input, shape index: {}]
  %s4 = inlined_call_operand.vmem [shape: bf16[2,32,32], index: 4, kind: input, shape index: {}]
  %s5 = inlined_call_operand.vmem [shape: bf16[2,32,32], index: 5, kind: input, shape index: {}]
  %s6 = inlined_call_operand.hbm [shape: bf16[2,32,64], index: 6, kind: input, shape index: {}]
  %s7 = inlined_call_operand.vmem [shape: f32[2,1,64], index: 7, kind: input, shape index: {}]
  %s8 = inlined_call_operand.vmem [shape: bf16[2,64,32], index: 8, kind: input, shape index: {}]
  %s9 = inlined_call_operand.hbm [shape: f32[2,8,32], index: 9, kind: input, shape index: {}]
  %s10 = inlined_call_operand.hbm [shape: f32[2,8,32], index: 10, kind: output, shape index: {}]
  %s11 = sld [smem:[#allocation0]]
  $region101: #{tpu_custom_call.1} parent=0
    _
  %s13 = ssub.s32 1, %s11
  %s14 = scalar_select 0, %s13, %s11
  $region1: #{tpu_custom_call.1} parent=0
    #allocation4 [shape = 'u8[8192]{0}', space=vmem, size = 0x2000, scoped, tag = 'input window, operand 0, single buffered']
    #allocation5 [shape = 's32[2]{0}', space=sflag, size = 0x8, scoped, tag = 'scoped memory for tpu_custom_call.1']
    #allocation6 [shape = 's32[2]{0}', space=sflag, size = 0x8, scoped, tag = 'scoped memory for tpu_custom_call.1']
    #allocation7 [shape = 'u8[8192]{0}', space=vmem, size = 0x2000, scoped, tag = 'input window, operand 1, single buffered']
    #allocation8 [shape = 's32[1]{0}', space=sflag, size = 0x4, scoped, tag = 'scoped memory for tpu_custom_call.1']
    #allocation9 [shape = 'u8[1024]{0}', space=vmem, size = 0x400, scoped, tag = 'input window, operand 3']
    #allocation10 [shape = 'u8[16384]{0}', space=vmem, size = 0x4000, scoped, tag = 'input window, operand 6']
    #allocation11 [shape = 'u8[8192]{0}', space=vmem, size = 0x2000, scoped, tag = 'input window, operand 9']
    #allocation12 [shape = 'u8[8192]{0}', space=vmem, size = 0x2000, scoped, tag = 'output window, operand 0, single buffered']
    %15 = vsyncpa [#allocation5], 0
    %16 = vsyncpa [#allocation8], 0
    %17 = vsyncpa [#allocation6], 0
    loop: start=0, step=1, limit=4
    $region2: #{tpu_custom_call.1} parent=1 // loop_pre_header
      _
    $region3: #{tpu_custom_call.1} parent=1 // loop_header
      %s19 = sphi 0, %s23
      %p20 = scmp.ge.s32.totalorder %s19, 4
      %s26 = sphi 0, %s38
      %s27 = sphi 0, %s34
      %s28 = sphi 0, %s26
      %s29 = sphi 0, %s27
      %s30 = sphi 0, %s28
      %s31 = sphi 0, %s29
      %s41 = sphi 0, %s43
      %s44 = sphi 0, %s41
      %s45 = sphi 0, %s44
      %s61 = sphi 0, %s45
      %s67 = sphi 0, %s69
      %s70 = sphi 0, %s67
      %s71 = sphi 0, %s70
      %s87 = sphi 0, %s71
      %s93 = sphi 0, %s95
      %s96 = sphi 0, %s93
      %s97 = sphi 0, %s96
      %s113 = sphi 0, %s97
      %s119 = sphi 0, %s121
      %s122 = sphi 0, %s119
      %s123 = sphi 0, %s122
      %s139 = sphi 0, %s123
      %s145 = sphi 0, %s147
      %s148 = sphi 0, %s145
      %s149 = sphi 0, %s148
      %s165 = sphi 0, %s149
      %s171 = sphi 0, %s173
      %s174 = sphi 0, %s171
      %s175 = sphi 0, %s174
      %s191 = sphi 0, %s175
      %s197 = sphi 0, %s199
      %s200 = sphi 0, %s197
      %s201 = sphi 0, %s200
      %s217 = sphi 0, %s201
      %s223 = sphi 0, %s225
      %s226 = sphi 0, %s223
      %s227 = sphi 0, %s226
      %s243 = sphi 0, %s227
      %s249 = sphi 0, %s251
      %s252 = sphi 0, %s249
      %s253 = sphi 0, %s252
      %s269 = sphi 0, %s253
      %s275 = sphi 0, %s277
      %s278 = sphi 0, %s275
      %s279 = sphi 0, %s278
      %s295 = sphi 0, %s279
      %s301 = sphi 0, %s303
      %s304 = sphi 0, %s301
      %s305 = sphi 0, %s304
      %s321 = sphi 0, %s305
    $region4: #{tpu_custom_call.1} parent=1 // loop_header_branch
      %22 = sbr.rel (%p20) target = $region8
    $region5: #{tpu_custom_call.1} parent=1 // loop_body
      %s24 = ssub.s32 %s19, 1
      %s25 = ssub.s32 %s19, 2
      %s32 = sadd.s32 1, %s27
      %p33 = scmp.ge.s32.totalorder %s32, 2
      %s34 = scalar_select %p33, 0, %s32
      %s35 = sadd.s32 1, %s26
      %s36 = scalar_select %p33, %s35, %s26
      %p37 = scmp.ge.s32.totalorder %s36, 1
      %s38 = scalar_select %p37, 0, %s36
      %s39 = ssub.s32 %s26, %s38
      %p40 = scmp.eq.s32.totalorder %s39, 0
      %s42 = sadd.s32 %s41, 1
      %s43 = scalar_select %p40, %s41, %s42
      %p46 = pneg %p40
      %p47 = scmp.eq.s32.totalorder %s19, 1
      %p48 = por %p46, %p47
      %p49 = scmp.ne.s32.totalorder %s41, %s44
      %p50 = scmp.eq.s32.totalorder %s19, 0
      %p51 = por %p49, %p50
      %p52 = scmp.ne.s32.totalorder %s41, %s44
      %p53 = scmp.eq.s32.totalorder %s24, 1
      %p54 = por %p52, %p53
      %p55 = scmp.ne.s32.totalorder %s44, %s45
      %p56 = scmp.eq.s32.totalorder %s24, 0
      %p57 = por %p55, %p56
      %p58 = scmp.ne.s32.totalorder %s44, %s45
      %p59 = scmp.eq.s32.totalorder %s25, 1
      %p60 = por %p58, %p59
      %p62 = scmp.ne.s32.totalorder %s45, %s61
      %p63 = scmp.eq.s32.totalorder %s25, 0
      %p64 = por %p62, %p63
      %s65 = ssub.s32 %s26, %s38
      %p66 = scmp.eq.s32.totalorder %s65, 0
      %s68 = sadd.s32 %s67, 1
      %s69 = scalar_select %p66, %s67, %s68
      %p72 = pneg %p66
      %p73 = scmp.eq.s32.totalorder %s19, 1
      %p74 = por %p72, %p73
      %p75 = scmp.ne.s32.totalorder %s67, %s70
      %p76 = scmp.eq.s32.totalorder %s19, 0
      %p77 = por %p75, %p76
      %p78 = scmp.ne.s32.totalorder %s67, %s70
      %p79 = scmp.eq.s32.totalorder %s24, 1
      %p80 = por %p78, %p79
      %p81 = scmp.ne.s32.totalorder %s70, %s71
      %p82 = scmp.eq.s32.totalorder %s24, 0
      %p83 = por %p81, %p82
      %p84 = scmp.ne.s32.totalorder %s70, %s71
      %p85 = scmp.eq.s32.totalorder %s25, 1
      %p86 = por %p84, %p85
      %p88 = scmp.ne.s32.totalorder %s71, %s87
      %p89 = scmp.eq.s32.totalorder %s25, 0
      %p90 = por %p88, %p89
      %s91 = ssub.s32 %s27, %s34
      %p92 = scmp.eq.s32.totalorder %s91, 0
      %s94 = sadd.s32 %s93, 1
      %s95 = scalar_select %p92, %s93, %s94
      %p98 = pneg %p92
      %p99 = scmp.eq.s32.totalorder %s19, 1
      %p100 = por %p98, %p99
      %p101 = scmp.ne.s32.totalorder %s93, %s96
      %p102 = scmp.eq.s32.totalorder %s19, 0
      %p103 = por %p101, %p102
      %p104 = scmp.ne.s32.totalorder %s93, %s96
      %p105 = scmp.eq.s32.totalorder %s24, 1
      %p106 = por %p104, %p105
      %p107 = scmp.ne.s32.totalorder %s96, %s97
      %p108 = scmp.eq.s32.totalorder %s24, 0
      %p109 = por %p107, %p108
      %p110 = scmp.ne.s32.totalorder %s96, %s97
      %p111 = scmp.eq.s32.totalorder %s25, 1
      %p112 = por %p110, %p111
      %p114 = scmp.ne.s32.totalorder %s97, %s113
      %p115 = scmp.eq.s32.totalorder %s25, 0
      %p116 = por %p114, %p115
      %s117 = ssub.s32 %s27, %s34
      %p118 = scmp.eq.s32.totalorder %s117, 0
      %s120 = sadd.s32 %s119, 1
      %s121 = scalar_select %p118, %s119, %s120
      %p124 = pneg %p118
      %p125 = scmp.eq.s32.totalorder %s19, 1
      %p126 = por %p124, %p125
      %p127 = scmp.ne.s32.totalorder %s119, %s122
      %p128 = scmp.eq.s32.totalorder %s19, 0
      %p129 = por %p127, %p128
      %p130 = scmp.ne.s32.totalorder %s119, %s122
      %p131 = scmp.eq.s32.totalorder %s24, 1
      %p132 = por %p130, %p131
      %p133 = scmp.ne.s32.totalorder %s122, %s123
      %p134 = scmp.eq.s32.totalorder %s24, 0
      %p135 = por %p133, %p134
      %p136 = scmp.ne.s32.totalorder %s122, %s123
      %p137 = scmp.eq.s32.totalorder %s25, 1
      %p138 = por %p136, %p137
      %p140 = scmp.ne.s32.totalorder %s123, %s139
      %p141 = scmp.eq.s32.totalorder %s25, 0
      %p142 = por %p140, %p141
      %s143 = ssub.s32 %s27, %s34
      %p144 = scmp.eq.s32.totalorder %s143, 0
      %s146 = sadd.s32 %s145, 1
      %s147 = scalar_select %p144, %s145, %s146
      %p150 = pneg %p144
      %p151 = scmp.eq.s32.totalorder %s19, 1
      %p152 = por %p150, %p151
      %p153 = scmp.ne.s32.totalorder %s145, %s148
      %p154 = scmp.eq.s32.totalorder %s19, 0
      %p155 = por %p153, %p154
      %p156 = scmp.ne.s32.totalorder %s145, %s148
      %p157 = scmp.eq.s32.totalorder %s24, 1
      %p158 = por %p156, %p157
      %p159 = scmp.ne.s32.totalorder %s148, %s149
      %p160 = scmp.eq.s32.totalorder %s24, 0
      %p161 = por %p159, %p160
      %p162 = scmp.ne.s32.totalorder %s148, %s149
      %p163 = scmp.eq.s32.totalorder %s25, 1
      %p164 = por %p162, %p163
      %p166 = scmp.ne.s32.totalorder %s149, %s165
      %p167 = scmp.eq.s32.totalorder %s25, 0
      %p168 = por %p166, %p167
      %s169 = ssub.s32 %s27, %s34
      %p170 = scmp.eq.s32.totalorder %s169, 0
      %s172 = sadd.s32 %s171, 1
      %s173 = scalar_select %p170, %s171, %s172
      %p176 = pneg %p170
      %p177 = scmp.eq.s32.totalorder %s19, 1
      %p178 = por %p176, %p177
      %p179 = scmp.ne.s32.totalorder %s171, %s174
      %p180 = scmp.eq.s32.totalorder %s19, 0
      %p181 = por %p179, %p180
      %p182 = scmp.ne.s32.totalorder %s171, %s174
      %p183 = scmp.eq.s32.totalorder %s24, 1
      %p184 = por %p182, %p183
      %p185 = scmp.ne.s32.totalorder %s174, %s175
      %p186 = scmp.eq.s32.totalorder %s24, 0
      %p187 = por %p185, %p186
      %p188 = scmp.ne.s32.totalorder %s174, %s175
      %p189 = scmp.eq.s32.totalorder %s25, 1
      %p190 = por %p188, %p189
      %p192 = scmp.ne.s32.totalorder %s175, %s191
      %p193 = scmp.eq.s32.totalorder %s25, 0
      %p194 = por %p192, %p193
      %s195 = ssub.s32 %s27, %s34
      %p196 = scmp.eq.s32.totalorder %s195, 0
      %s198 = sadd.s32 %s197, 1
      %s199 = scalar_select %p196, %s197, %s198
      %p202 = pneg %p196
      %p203 = scmp.eq.s32.totalorder %s19, 1
      %p204 = por %p202, %p203
      %p205 = scmp.ne.s32.totalorder %s197, %s200
      %p206 = scmp.eq.s32.totalorder %s19, 0
      %p207 = por %p205, %p206
      %p208 = scmp.ne.s32.totalorder %s197, %s200
      %p209 = scmp.eq.s32.totalorder %s24, 1
      %p210 = por %p208, %p209
      %p211 = scmp.ne.s32.totalorder %s200, %s201
      %p212 = scmp.eq.s32.totalorder %s24, 0
      %p213 = por %p211, %p212
      %p214 = scmp.ne.s32.totalorder %s200, %s201
      %p215 = scmp.eq.s32.totalorder %s25, 1
      %p216 = por %p214, %p215
      %p218 = scmp.ne.s32.totalorder %s201, %s217
      %p219 = scmp.eq.s32.totalorder %s25, 0
      %p220 = por %p218, %p219
      %s221 = ssub.s32 %s27, %s34
      %p222 = scmp.eq.s32.totalorder %s221, 0
      %s224 = sadd.s32 %s223, 1
      %s225 = scalar_select %p222, %s223, %s224
      %p228 = pneg %p222
      %p229 = scmp.eq.s32.totalorder %s19, 1
      %p230 = por %p228, %p229
      %p231 = scmp.ne.s32.totalorder %s223, %s226
      %p232 = scmp.eq.s32.totalorder %s19, 0
      %p233 = por %p231, %p232
      %p234 = scmp.ne.s32.totalorder %s223, %s226
      %p235 = scmp.eq.s32.totalorder %s24, 1
      %p236 = por %p234, %p235
      %p237 = scmp.ne.s32.totalorder %s226, %s227
      %p238 = scmp.eq.s32.totalorder %s24, 0
      %p239 = por %p237, %p238
      %p240 = scmp.ne.s32.totalorder %s226, %s227
      %p241 = scmp.eq.s32.totalorder %s25, 1
      %p242 = por %p240, %p241
      %p244 = scmp.ne.s32.totalorder %s227, %s243
      %p245 = scmp.eq.s32.totalorder %s25, 0
      %p246 = por %p244, %p245
      %s247 = ssub.s32 %s27, %s34
      %p248 = scmp.eq.s32.totalorder %s247, 0
      %s250 = sadd.s32 %s249, 1
      %s251 = scalar_select %p248, %s249, %s250
      %p254 = pneg %p248
      %p255 = scmp.eq.s32.totalorder %s19, 1
      %p256 = por %p254, %p255
      %p257 = scmp.ne.s32.totalorder %s249, %s252
      %p258 = scmp.eq.s32.totalorder %s19, 0
      %p259 = por %p257, %p258
      %p260 = scmp.ne.s32.totalorder %s249, %s252
      %p261 = scmp.eq.s32.totalorder %s24, 1
      %p262 = por %p260, %p261
      %p263 = scmp.ne.s32.totalorder %s252, %s253
      %p264 = scmp.eq.s32.totalorder %s24, 0
      %p265 = por %p263, %p264
      %p266 = scmp.ne.s32.totalorder %s252, %s253
      %p267 = scmp.eq.s32.totalorder %s25, 1
      %p268 = por %p266, %p267
      %p270 = scmp.ne.s32.totalorder %s253, %s269
      %p271 = scmp.eq.s32.totalorder %s25, 0
      %p272 = por %p270, %p271
      %s273 = ssub.s32 %s27, %s34
      %p274 = scmp.eq.s32.totalorder %s273, 0
      %s276 = sadd.s32 %s275, 1
      %s277 = scalar_select %p274, %s275, %s276
      %p280 = pneg %p274
      %p281 = scmp.eq.s32.totalorder %s19, 1
      %p282 = por %p280, %p281
      %p283 = scmp.ne.s32.totalorder %s275, %s278
      %p284 = scmp.eq.s32.totalorder %s19, 0
      %p285 = por %p283, %p284
      %p286 = scmp.ne.s32.totalorder %s275, %s278
      %p287 = scmp.eq.s32.totalorder %s24, 1
      %p288 = por %p286, %p287
      %p289 = scmp.ne.s32.totalorder %s278, %s279
      %p290 = scmp.eq.s32.totalorder %s24, 0
      %p291 = por %p289, %p290
      %p292 = scmp.ne.s32.totalorder %s278, %s279
      %p293 = scmp.eq.s32.totalorder %s25, 1
      %p294 = por %p292, %p293
      %p296 = scmp.ne.s32.totalorder %s279, %s295
      %p297 = scmp.eq.s32.totalorder %s25, 0
      %p298 = por %p296, %p297
      %s299 = ssub.s32 %s26, %s38
      %p300 = scmp.eq.s32.totalorder %s299, 0
      %s302 = sadd.s32 %s301, 1
      %s303 = scalar_select %p300, %s301, %s302
      %p306 = pneg %p300
      %p307 = scmp.eq.s32.totalorder %s19, 1
      %p308 = por %p306, %p307
      %p309 = scmp.ne.s32.totalorder %s301, %s304
      %p310 = scmp.eq.s32.totalorder %s19, 0
      %p311 = por %p309, %p310
      %p312 = scmp.ne.s32.totalorder %s301, %s304
      %p313 = scmp.eq.s32.totalorder %s24, 1
      %p314 = por %p312, %p313
      %p315 = scmp.ne.s32.totalorder %s304, %s305
      %p316 = scmp.eq.s32.totalorder %s24, 0
      %p317 = por %p315, %p316
      %p318 = scmp.ne.s32.totalorder %s304, %s305
      %p319 = scmp.eq.s32.totalorder %s25, 1
      %p320 = por %p318, %p319
      %p322 = scmp.ne.s32.totalorder %s305, %s321
      %p323 = scmp.eq.s32.totalorder %s25, 0
      %p324 = por %p322, %p323
      %p325 = scmp.le.s32.totalorder 1, %s19
      %p326 = scmp.lt.s32.totalorder %s19, 3
      %p327 = pnand %p325, %p326
      %p328 = pneg %p327
      // Predicated region
      $region9: #{tpu_custom_call.1} parent=5 // pred_check
        _
      $region10: #{tpu_custom_call.1} parent=5 // pred_check_branch
        %330 = sbr.rel (%p327) target = $region12
      $region11: #{tpu_custom_call.1} parent=5 // pred_region
        %s331 = ssub.s32 %s19, 1
        // Predicated region
        $region13: #{tpu_custom_call.1} parent=11 // pred_check
          %p332 = pneg %p57
        $region14: #{tpu_custom_call.1} parent=11 // pred_check_branch
          %334 = sbr.rel (%p332) target = $region16
        $region15: #{tpu_custom_call.1} parent=11 // pred_region
          %s335 = smul.u32 2, %s28
          %337 = vsyncadd [#allocation5], 0
          %s338 = smul.addr %s335, 8
          %s339 = scalar_lea.hbm %s0, %s338
          %s340 = sshll.u32 %s339, 4
          %s341 = int_to_ptr.hbm [resolvable:$true] %s340
          %s342 = sshll.u32 [#allocation4], 4
          %s343 = int_to_ptr.vmem [resolvable:$true] %s342
          %348 = dma.hbm_to_vmem [thread:$0]  %s341, 256, %s343, [#allocation5], 128, 128, 8
        $region16: #{tpu_custom_call.1} parent=11 // pred_fallthru
          _
        // Predicated region
        $region17: #{tpu_custom_call.1} parent=11 // pred_check
          %p349 = pneg %p83
        $region18: #{tpu_custom_call.1} parent=11 // pred_check_branch
          %351 = sbr.rel (%p349) target = $region20
        $region19: #{tpu_custom_call.1} parent=11 // pred_region
          %s352 = smul.u32 2, %s28
          %354 = vsyncadd [#allocation8], 0
          %s355 = smul.addr %s352, 8
          %s356 = scalar_lea.hbm %s1, %s355
          %s357 = sshll.u32 %s356, 4
          %s358 = int_to_ptr.hbm [resolvable:$true] %s357
          %s359 = sshll.u32 [#allocation7], 4
          %s360 = int_to_ptr.vmem [resolvable:$true] %s359
          %365 = dma.hbm_to_vmem [thread:$0]  %s358, 256, %s360, [#allocation8], 128, 128, 8
        $region20: #{tpu_custom_call.1} parent=11 // pred_fallthru
          _
      $region12: #{tpu_custom_call.1} parent=5 // pred_fallthru
        _
      %p366 = scmp.lt.s32.totalorder %s19, 2
      // Predicated region
      $region21: #{tpu_custom_call.1} parent=5 // pred_check
        %p367 = pneg %p366
      $region22: #{tpu_custom_call.1} parent=5 // pred_check_branch
        %369 = sbr.rel (%p367) target = $region24
      $region23: #{tpu_custom_call.1} parent=5 // pred_region
        // Predicated region
        $region25: #{tpu_custom_call.1} parent=23 // pred_check
          %p370 = pneg %p103
        $region26: #{tpu_custom_call.1} parent=23 // pred_check_branch
          %372 = sbr.rel (%p370) target = $region28
        $region27: #{tpu_custom_call.1} parent=23 // pred_region
          %p373 = scmp.lt.s32.totalorder %s27, 1
          %s374 = scalar_select %p373, %s27, 1
          %s375 = smul.addr %s374, 4
          %s376 = smul.addr %s375, 4
          %s377 = scalar_lea.vmem %s2, %s376
        $region28: #{tpu_custom_call.1} parent=23 // pred_fallthru
          _
        // Predicated region
        $region29: #{tpu_custom_call.1} parent=23 // pred_check
          %p378 = pneg %p129
        $region30: #{tpu_custom_call.1} parent=23 // pred_check_branch
          %380 = sbr.rel (%p378) target = $region32
        $region31: #{tpu_custom_call.1} parent=23 // pred_region
          %s381 = sand.u32 %s19, 1
          %s382 = scalar_lea.sflag [#allocation5], %s381
          %s383 = sand.u32 %s119, 1
          %s384 = scalar_lea.vmem [#allocation9], %s383
          %386 = vsyncadd %s382, 0
          %s387 = scalar_lea.hbm %s3, %s27
          %s389 = sshll.u32 %s387, 4
          %s390 = int_to_ptr.hbm [resolvable:$true] %s389
          %s391 = sshll.u32 %s384, 4
          %s392 = int_to_ptr.vmem [resolvable:$true] %s391
          %394 = dma.hbm_to_vmem [thread:$0]  %s390, 16, %s392, %s382
        $region32: #{tpu_custom_call.1} parent=23 // pred_fallthru
          _
        // Predicated region
        $region33: #{tpu_custom_call.1} parent=23 // pred_check
          %p395 = pneg %p155
        $region34: #{tpu_custom_call.1} parent=23 // pred_check_branch
          %397 = sbr.rel (%p395) target = $region36
        $region35: #{tpu_custom_call.1} parent=23 // pred_region
          %p398 = scmp.lt.s32.totalorder %s27, 1
          %s399 = scalar_select %p398, %s27, 1
          %s400 = smul.addr %s399, 4
          %s401 = smul.addr %s400, 4
          %s402 = scalar_lea.vmem %s4, %s401
        $region36: #{tpu_custom_call.1} parent=23 // pred_fallthru
          _
        // Predicated region
        $region37: #{tpu_custom_call.1} parent=23 // pred_check
          %p403 = pneg %p181
        $region38: #{tpu_custom_call.1} parent=23 // pred_check_branch
          %405 = sbr.rel (%p403) target = $region40
        $region39: #{tpu_custom_call.1} parent=23 // pred_region
          %p406 = scmp.lt.s32.totalorder %s27, 1
          %s407 = scalar_select %p406, %s27, 1
          %s408 = smul.addr %s407, 4
          %s409 = smul.addr %s408, 4
          %s410 = scalar_lea.vmem %s5, %s409
        $region40: #{tpu_custom_call.1} parent=23 // pred_fallthru
          _
        // Predicated region
        $region41: #{tpu_custom_call.1} parent=23 // pred_check
          %p411 = pneg %p207
        $region42: #{tpu_custom_call.1} parent=23 // pred_check_branch
          %413 = sbr.rel (%p411) target = $region44
        $region43: #{tpu_custom_call.1} parent=23 // pred_region
          %s414 = sand.u32 %s19, 1
          %s415 = scalar_lea.sflag [#allocation5], %s414
          %s416 = sand.u32 %s197, 1
          %s417 = smul.addr %s416, 16
          %s418 = scalar_lea.vmem [#allocation10], %s417
          %420 = vsyncadd %s415, 0
          %s421 = smul.addr %s27, 4
          %s422 = smul.addr %s421, 4
          %s423 = scalar_lea.hbm %s6, %s422
          %s424 = sshll.u32 %s423, 4
          %s425 = int_to_ptr.hbm [resolvable:$true] %s424
          %s426 = sshll.u32 %s418, 4
          %s427 = int_to_ptr.vmem [resolvable:$true] %s426
          %432 = dma.hbm_to_vmem [thread:$0]  %s425, 256, %s427, %s415, 64, 64, 4
        $region44: #{tpu_custom_call.1} parent=23 // pred_fallthru
          _
        // Predicated region
        $region45: #{tpu_custom_call.1} parent=23 // pred_check
          %p433 = pneg %p233
        $region46: #{tpu_custom_call.1} parent=23 // pred_check_branch
          %435 = sbr.rel (%p433) target = $region48
        $region47: #{tpu_custom_call.1} parent=23 // pred_region
          %p436 = scmp.lt.s32.totalorder %s27, 1
          %s437 = scalar_select %p436, %s27, 1
          %s438 = scalar_lea.vmem %s7, %s437
        $region48: #{tpu_custom_call.1} parent=23 // pred_fallthru
          _
        // Predicated region
        $region49: #{tpu_custom_call.1} parent=23 // pred_check
          %p439 = pneg %p259
        $region50: #{tpu_custom_call.1} parent=23 // pred_check_branch
          %441 = sbr.rel (%p439) target = $region52
        $region51: #{tpu_custom_call.1} parent=23 // pred_region
          %p442 = scmp.lt.s32.totalorder %s27, 1
          %s443 = scalar_select %p442, %s27, 1
          %s444 = smul.addr %s443, 8
          %s445 = smul.addr %s444, 4
          %s446 = scalar_lea.vmem %s8, %s445
        $region52: #{tpu_custom_call.1} parent=23 // pred_fallthru
          _
        // Predicated region
        $region53: #{tpu_custom_call.1} parent=23 // pred_check
          %p447 = pneg %p285
        $region54: #{tpu_custom_call.1} parent=23 // pred_check_branch
          %449 = sbr.rel (%p447) target = $region56
        $region55: #{tpu_custom_call.1} parent=23 // pred_region
          %s450 = sand.u32 %s19, 1
          %s451 = scalar_lea.sflag [#allocation5], %s450
          %s452 = sand.u32 %s275, 1
          %s453 = smul.addr %s452, 8
          %s454 = scalar_lea.vmem [#allocation11], %s453
          %456 = vsyncadd %s451, 0
          %s457 = smul.addr %s27, 8
          %s458 = scalar_lea.hbm %s9, %s457
          %s460 = sshll.u32 %s458, 4
          %s461 = int_to_ptr.hbm [resolvable:$true] %s460
          %s462 = sshll.u32 %s454, 4
          %s463 = int_to_ptr.vmem [resolvable:$true] %s462
          %465 = dma.hbm_to_vmem [thread:$0]  %s461, 128, %s463, %s451
        $region56: #{tpu_custom_call.1} parent=23 // pred_fallthru
          _
      $region24: #{tpu_custom_call.1} parent=5 // pred_fallthru
        _
      %p466 = scmp.le.s32.totalorder 1, %s19
      %p467 = scmp.lt.s32.totalorder %s19, 3
      %p468 = pnand %p466, %p467
      %p469 = pneg %p468
      // Predicated region
      $region57: #{tpu_custom_call.1} parent=5 // pred_check
        _
      $region58: #{tpu_custom_call.1} parent=5 // pred_check_branch
        %471 = sbr.rel (%p468) target = $region60
      $region59: #{tpu_custom_call.1} parent=5 // pred_region
        %s472 = ssub.s32 %s19, 1
        // Predicated region
        $region61: #{tpu_custom_call.1} parent=59 // pred_check
          %p473 = pneg %p57
        $region62: #{tpu_custom_call.1} parent=59 // pred_check_branch
          %475 = sbr.rel (%p473) target = $region64
        $region63: #{tpu_custom_call.1} parent=59 // pred_region
          %477 = dma.done [#allocation5], 256
        $region64: #{tpu_custom_call.1} parent=59 // pred_fallthru
          _
        // Predicated region
        $region65: #{tpu_custom_call.1} parent=59 // pred_check
          %p478 = pneg %p83
        $region66: #{tpu_custom_call.1} parent=59 // pred_check_branch
          %480 = sbr.rel (%p478) target = $region68
        $region67: #{tpu_custom_call.1} parent=59 // pred_region
          %482 = dma.done [#allocation8], 256
        $region68: #{tpu_custom_call.1} parent=59 // pred_fallthru
          _
        %s483 = sand.u32 %s24, 1
        %s484 = scalar_lea.sflag [#allocation5], %s483
        %s485 = sand.u32 %s122, 1
        %s486 = scalar_lea.vmem [#allocation9], %s485
        // Predicated region
        $region69: #{tpu_custom_call.1} parent=59 // pred_check
          %p487 = pneg %p135
        $region70: #{tpu_custom_call.1} parent=59 // pred_check_branch
          %489 = sbr.rel (%p487) target = $region72
        $region71: #{tpu_custom_call.1} parent=59 // pred_region
          %491 = dma.done %s484, 16
        $region72: #{tpu_custom_call.1} parent=59 // pred_fallthru
          _
        %s492 = sand.u32 %s24, 1
        %s493 = scalar_lea.sflag [#allocation5], %s492
        %s494 = sand.u32 %s200, 1
        %s495 = smul.addr %s494, 16
        %s496 = scalar_lea.vmem [#allocation10], %s495
        // Predicated region
        $region73: #{tpu_custom_call.1} parent=59 // pred_check
          %p497 = pneg %p213
        $region74: #{tpu_custom_call.1} parent=59 // pred_check_branch
          %499 = sbr.rel (%p497) target = $region76
        $region75: #{tpu_custom_call.1} parent=59 // pred_region
          %501 = dma.done %s493, 256
        $region76: #{tpu_custom_call.1} parent=59 // pred_fallthru
          _
        %s502 = sand.u32 %s24, 1
        %s503 = scalar_lea.sflag [#allocation5], %s502
        %s504 = sand.u32 %s278, 1
        %s505 = smul.addr %s504, 8
        %s506 = scalar_lea.vmem [#allocation11], %s505
        // Predicated region
        $region77: #{tpu_custom_call.1} parent=59 // pred_check
          %p507 = pneg %p291
        $region78: #{tpu_custom_call.1} parent=59 // pred_check_branch
          %509 = sbr.rel (%p507) target = $region80
        $region79: #{tpu_custom_call.1} parent=59 // pred_region
          %511 = dma.done %s503, 128
        $region80: #{tpu_custom_call.1} parent=59 // pred_fallthru
          _
        %p512 = pneg %p57
        %p513 = pneg %p54
        %p514 = pneg %p83
        %p515 = pneg %p80
        %p516 = scmp.lt.s32.totalorder %s29, 1
        %s517 = scalar_select %p516, %s29, 1
        %s518 = smul.addr %s517, 4
        %s519 = smul.addr %s518, 4
        %s520 = scalar_lea.vmem %s2, %s519
        %p521 = pneg %p109
        %p522 = pneg %p106
        %s523 = sand.u32 %s24, 1
        %s524 = scalar_lea.sflag [#allocation5], %s523
        %s525 = sand.u32 %s122, 1
        %s526 = scalar_lea.vmem [#allocation9], %s525
        %p527 = pneg %p135
        %p528 = pneg %p132
        %p529 = scmp.lt.s32.totalorder %s29, 1
        %s530 = scalar_select %p529, %s29, 1
        %s531 = smul.addr %s530, 4
        %s532 = smul.addr %s531, 4
        %s533 = scalar_lea.vmem %s4, %s532
        %p534 = pneg %p161
        %p535 = pneg %p158
        %p536 = scmp.lt.s32.totalorder %s29, 1
        %s537 = scalar_select %p536, %s29, 1
        %s538 = smul.addr %s537, 4
        %s539 = smul.addr %s538, 4
        %s540 = scalar_lea.vmem %s5, %s539
        %p541 = pneg %p187
        %p542 = pneg %p184
        %s543 = sand.u32 %s24, 1
        %s544 = scalar_lea.sflag [#allocation5], %s543
        %s545 = sand.u32 %s200, 1
        %s546 = smul.addr %s545, 16
        %s547 = scalar_lea.vmem [#allocation10], %s546
        %p548 = pneg %p213
        %p549 = pneg %p210
        %p550 = scmp.lt.s32.totalorder %s29, 1
        %s551 = scalar_select %p550, %s29, 1
        %s552 = scalar_lea.vmem %s7, %s551
        %p553 = pneg %p239
        %p554 = pneg %p236
        %p555 = scmp.lt.s32.totalorder %s29, 1
        %s556 = scalar_select %p555, %s29, 1
        %s557 = smul.addr %s556, 8
        %s558 = smul.addr %s557, 4
        %s559 = scalar_lea.vmem %s8, %s558
        %p560 = pneg %p265
        %p561 = pneg %p262
        %s562 = sand.u32 %s24, 1
        %s563 = scalar_lea.sflag [#allocation5], %s562
        %s564 = sand.u32 %s278, 1
        %s565 = smul.addr %s564, 8
        %s566 = scalar_lea.vmem [#allocation11], %s565
        %p567 = pneg %p291
        %p568 = pneg %p288
        %p569 = pneg %p317
        %p570 = pneg %p314
        %s571 = smul.u32 2, %s28
        %s572 = smul.u32 2, %s28
        %p573 = scmp.lt.s32.totalorder %s29, 1
        %s574 = scalar_select %p573, %s29, 1
        %s575 = smul.addr %s574, 4
        %s576 = smul.addr %s575, 4
        %s577 = scalar_lea.vmem %s2, %s576
        %p578 = scmp.lt.s32.totalorder %s29, 1
        %s579 = scalar_select %p578, %s29, 1
        %s580 = smul.addr %s579, 4
        %s581 = smul.addr %s580, 4
        %s582 = scalar_lea.vmem %s4, %s581
        %p583 = scmp.lt.s32.totalorder %s29, 1
        %s584 = scalar_select %p583, %s29, 1
        %s585 = smul.addr %s584, 4
        %s586 = smul.addr %s585, 4
        %s587 = scalar_lea.vmem %s5, %s586
        %p588 = scmp.lt.s32.totalorder %s29, 1
        %s589 = scalar_select %p588, %s29, 1
        %s590 = scalar_lea.vmem %s7, %s589
        %p591 = scmp.lt.s32.totalorder %s29, 1
        %s592 = scalar_select %p591, %s29, 1
        %s593 = smul.addr %s592, 8
        %s594 = smul.addr %s593, 4
        %s595 = scalar_lea.vmem %s8, %s594
        %s596 = smul.u32 2, %s28
        %p598 = scmp.eq.s32.totalorder %s29, 0
        // Predicated region
        $region81: #{tpu_custom_call.1} parent=59 // pred_check
          %p599 = pneg %p598
        $region82: #{tpu_custom_call.1} parent=59 // pred_check_branch
          %601 = sbr.rel (%p599) target = $region84
        $region83: #{tpu_custom_call.1} parent=59 // pred_region
          %v602 = vld [vmem:[#allocation4] sm:$0xff]
          %v603 = vld [vmem:[#allocation4 + $0x8] sm:$0xff]
          %vm604 = vcmask 261120
          %605 = vst.msk [vmem:[#allocation2] sm:$0xff] %vm604, %v602
          %606 = vst.msk [vmem:[#allocation2 + $0x8] sm:$0xff] %vm604, %v603
        $region84: #{tpu_custom_call.1} parent=59 // pred_fallthru
          _
        %v607 = vld [vmem:[#allocation2] sm:$0xff]
        %v608 = vld [vmem:[#allocation2 + $0x8] sm:$0xff]
        %v609 = vld [vmem:[#allocation7] sm:$0xff]
        %v610 = vld [vmem:[#allocation7 + $0x8] sm:$0xff]
        %v611 = vld [vmem:[%s506] sm:$0xff]
        %v612 = vadd.f32 %v607, %v609
        %v613 = vadd.f32 %v608, %v610
        %v614 = vpack.c.bf16 %v613, %v612
        %v615 = vpack.c.bf16 %v608, %v607
        %v616 = vld [vmem:[%s577] sm:$0xf]
        %v617 = vld [vmem:[%s577 + $0x4] sm:$0xf]
        %v618 = vld [vmem:[%s577 + $0x8] sm:$0xf]
        %v619 = vld [vmem:[%s577 + $0xc] sm:$0xf]
        %v620 = vld [vmem:[%s486] sm:$0x1]
        %v622 = vperm.slane %v620, 0
        %v628 = vunpack.c.l.b16 %v616
        %v629 = vunpack.c.l.b16 %v617
        %v630 = vunpack.c.l.b16 %v618
        %v631 = vunpack.c.l.b16 %v619
        %v632 = vpack.c.b16 %v629, %v628
        %v633 = vpack.c.b16 %v631, %v630
        %vm636 = vcmask 261120
        %v638 = vsel %vm636, %v614, 0
        %640 = vmatpush.bf16.msra.mxu0 0
        %641 = vmatpush.bf16.msra.mxu0 0
        %642 = vmatpush.bf16.msra.mxu0 0
        %643 = vmatpush.bf16.msra.mxu0 0
        %644 = vmatpush.bf16.msra.mxu0 0
        %645 = vmatpush.bf16.msra.mxu0 0
        %646 = vmatpush.bf16.msra.mxu0 %v633
        %647 = vmatpush.bf16.msra.mxu0 %v632
        %648 = vmatmul.bf16.gmra.mxu0 %v638
        %v649 = vpop.f32.mrf.mxu0
        %v650 = vadd.f32 %v622, %v649
        %v651 = vpop.f32.mrf.mxu0
        %v652 = vadd.f32 %v622, %v651
        %653 = vdwg.mxu0
        %v654 = vld [vmem:[%s582] sm:$0xf]
        %v655 = vld [vmem:[%s582 + $0x4] sm:$0xf]
        %v656 = vld [vmem:[%s582 + $0x8] sm:$0xf]
        %v657 = vld [vmem:[%s582 + $0xc] sm:$0xf]
        %v658 = vperm.slane %v611, 0
        %v663 = vunpack.c.l.b16 %v654
        %v664 = vunpack.c.l.b16 %v655
        %v665 = vunpack.c.l.b16 %v656
        %v666 = vunpack.c.l.b16 %v657
        %v667 = vpack.c.b16 %v664, %v663
        %v668 = vpack.c.b16 %v666, %v665
        %v672 = vsel %vm636, %v615, 0
        %674 = vmatpush.bf16.msra.mxu0 0
        %675 = vmatpush.bf16.msra.mxu0 0
        %676 = vmatpush.bf16.msra.mxu0 0
        %677 = vmatpush.bf16.msra.mxu0 0
        %678 = vmatpush.bf16.msra.mxu0 0
        %679 = vmatpush.bf16.msra.mxu0 0
        %680 = vmatpush.bf16.msra.mxu0 %v668
        %681 = vmatpush.bf16.msra.mxu0 %v667
        %682 = vmatmul.bf16.gmra.mxu0 %v672
        %v683 = vpop.f32.mrf.mxu0
        %v684 = vadd.f32 %v658, %v683
        %v685 = vpop.f32.mrf.mxu0
        %v686 = vadd.f32 %v658, %v685
        %687 = vdwg.mxu0
        %v688 = vpack.c.bf16 %v650, %v650
        %v689 = vpack.c.bf16 %v652, %v652
        %v690 = vpack.c.bf16 %v684, %v684
        %v691 = vpack.c.bf16 %v686, %v686
        %v693 = vunpack.c.l.b16 %v688
        %v694 = vpack.c.b16 %v693, %v693
        %695 = vrot.lane.b32.xlu0 %v694, 96
        %v696 = vpop.permute.xlu0 %695
        %vm697 = vcmask 64512
        %v699 = vsel %vm697, %v688, 0
        %v702 = vsel %vm697, %v696, 0
        %704 = vmatpush.bf16.xpose.msra.mxu0 0
        %705 = vmatpush.bf16.xpose.msra.mxu0 0
        %706 = vmatpush.bf16.xpose.msra.mxu0 0
        %707 = vmatpush.bf16.xpose.msra.mxu0 0
        %708 = vmatpush.bf16.xpose.msra.mxu0 0
        %709 = vmatpush.bf16.xpose.msra.mxu0 0
        %710 = vmatpush.bf16.xpose.msra.mxu0 0
        %711 = vmatpush.bf16.xpose.msra.mxu0 %v702
        %712 = vmatmul.bf16.gmra.mxu0 %v699
        %v713 = vpop.f32.mrf.mxu0
        %v714 = vadd.f32 0.0, %v713
        %v715 = vpop.f32.mrf.mxu0
        %716 = vdwg.mxu0
        %v718 = vunpack.c.l.b16 %v689
        %v719 = vpack.c.b16 %v718, %v718
        %720 = vrot.lane.b32.xlu0 %v719, 96
        %v721 = vpop.permute.xlu0 %720
        %v723 = vsel %vm697, %v689, 0
        %v726 = vsel %vm697, %v721, 0
        %728 = vmatpush.bf16.xpose.msra.mxu0 0
        %729 = vmatpush.bf16.xpose.msra.mxu0 0
        %730 = vmatpush.bf16.xpose.msra.mxu0 0
        %731 = vmatpush.bf16.xpose.msra.mxu0 0
        %732 = vmatpush.bf16.xpose.msra.mxu0 0
        %733 = vmatpush.bf16.xpose.msra.mxu0 0
        %734 = vmatpush.bf16.xpose.msra.mxu0 0
        %735 = vmatpush.bf16.xpose.msra.mxu0 %v726
        %736 = vmatmul.bf16.gmra.mxu0 %v723
        %v737 = vpop.f32.mrf.mxu0
        %v738 = vadd.f32 0.0, %v737
        %v739 = vpop.f32.mrf.mxu0
        %740 = vdwg.mxu0
        %v741 = vsel %vm697, %v714, -inf
        %742 = vmax.xlane.f32.xlu0 %v741
        %v743 = vpop.xlane.xlu0 %742
        %v744 = vsel %vm697, %v738, -inf
        %745 = vmax.xlane.f32.xlu0 %v744
        %v746 = vpop.xlane.xlu0 %745
        %v747 = vsub.f32 %v714, %v743
        %v748 = vsub.f32 %v738, %v746
        %v749 = vmul.f32 %v747, 1.442695
        %v750 = vpow.pop %v749
        %v751 = vmul.f32 %v748, 1.442695
        %v752 = vpow.pop %v751
        %v753 = vsel %vm697, %v750, 0.0
        %754 = vadd.xlane.f32.xlu0 %v753
        %v755 = vpop.xlane.xlu0 %754
        %v756 = vsel %vm697, %v752, 0.0
        %757 = vadd.xlane.f32.xlu0 %v756
        %v758 = vpop.xlane.xlu0 %757
        %v759 = vpack.c.bf16 %v750, %v750
        %v760 = vpack.c.bf16 %v752, %v752
        %v762 = vsel %vm697, %v759, 0
        %vm764 = vcmask 1043456
        %v766 = vsel %vm764, %v690, 0
        %768 = vmatpush.bf16.msra.mxu0 0
        %769 = vmatpush.bf16.msra.mxu0 0
        %770 = vmatpush.bf16.msra.mxu0 0
        %771 = vmatpush.bf16.msra.mxu0 0
        %772 = vmatpush.bf16.msra.mxu0 0
        %773 = vmatpush.bf16.msra.mxu0 0
        %774 = vmatpush.bf16.msra.mxu0 0
        %775 = vmatpush.bf16.msra.mxu0 %v766
        %776 = vmatmul.bf16.gmra.mxu0 %v762
        %v777 = vpop.f32.mrf.mxu0
        %v778 = vadd.f32 0.0, %v777
        %v779 = vpop.f32.mrf.mxu0
        %780 = vdwg.mxu0
        %v782 = vsel %vm697, %v760, 0
        %v785 = vsel %vm764, %v691, 0
        %787 = vmatpush.bf16.msra.mxu0 0
        %788 = vmatpush.bf16.msra.mxu0 0
        %789 = vmatpush.bf16.msra.mxu0 0
        %790 = vmatpush.bf16.msra.mxu0 0
        %791 = vmatpush.bf16.msra.mxu0 0
        %792 = vmatpush.bf16.msra.mxu0 0
        %793 = vmatpush.bf16.msra.mxu0 0
        %794 = vmatpush.bf16.msra.mxu0 %v785
        %795 = vmatmul.bf16.gmra.mxu0 %v782
        %v796 = vpop.f32.mrf.mxu0
        %v797 = vadd.f32 0.0, %v796
        %v798 = vpop.f32.mrf.mxu0
        %799 = vdwg.mxu0
        %v800 = vrcp.pop %v755
        %v801 = vrcp.pop %v758
        %v802 = vmul.f32 %v778, %v800
        %v803 = vmul.f32 %v797, %v801
        %804 = vst.msk [vmem:[#allocation3] sm:$0xff] %vm697, %v802
        %805 = vst.msk [vmem:[#allocation3 + $0x8] sm:$0xff] %vm697, %v803
        %806 = vrot.lane.b32.xlu0 %v694, 120
        %v807 = vpop.permute.xlu0 %806
        %808 = vrot.lane.b32.xlu0 %v694, 88
        %v809 = vpop.permute.xlu0 %808
        %v811 = vsel %vm697, %v807, 0
        %v814 = vsel %vm697, %v809, 0
        %816 = vmatpush.bf16.xpose.msra.mxu0 0
        %817 = vmatpush.bf16.xpose.msra.mxu0 0
        %818 = vmatpush.bf16.xpose.msra.mxu0 0
        %819 = vmatpush.bf16.xpose.msra.mxu0 0
        %820 = vmatpush.bf16.xpose.msra.mxu0 0
        %821 = vmatpush.bf16.xpose.msra.mxu0 0
        %822 = vmatpush.bf16.xpose.msra.mxu0 0
        %823 = vmatpush.bf16.xpose.msra.mxu0 %v814
        %824 = vmatmul.bf16.gmra.mxu0 %v811
        %v825 = vpop.f32.mrf.mxu0
        %v826 = vadd.f32 0.0, %v825
        %v827 = vpop.f32.mrf.mxu0
        %828 = vdwg.mxu0
        %829 = vrot.lane.b32.xlu0 %v719, 120
        %v830 = vpop.permute.xlu0 %829
        %831 = vrot.lane.b32.xlu0 %v719, 88
        %v832 = vpop.permute.xlu0 %831
        %v834 = vsel %vm697, %v830, 0
        %v837 = vsel %vm697, %v832, 0
        %839 = vmatpush.bf16.xpose.msra.mxu0 0
        %840 = vmatpush.bf16.xpose.msra.mxu0 0
        %841 = vmatpush.bf16.xpose.msra.mxu0 0
        %842 = vmatpush.bf16.xpose.msra.mxu0 0
        %843 = vmatpush.bf16.xpose.msra.mxu0 0
        %844 = vmatpush.bf16.xpose.msra.mxu0 0
        %845 = vmatpush.bf16.xpose.msra.mxu0 0
        %846 = vmatpush.bf16.xpose.msra.mxu0 %v837
        %847 = vmatmul.bf16.gmra.mxu0 %v834
        %v848 = vpop.f32.mrf.mxu0
        %v849 = vadd.f32 0.0, %v848
        %v850 = vpop.f32.mrf.mxu0
        %851 = vdwg.mxu0
        %v852 = vsel %vm697, %v826, -inf
        %853 = vmax.xlane.f32.xlu0 %v852
        %v854 = vpop.xlane.xlu0 %853
        %v855 = vsel %vm697, %v849, -inf
        %856 = vmax.xlane.f32.xlu0 %v855
        %v857 = vpop.xlane.xlu0 %856
        %v858 = vsub.f32 %v826, %v854
        %v859 = vsub.f32 %v849, %v857
        %v860 = vmul.f32 %v858, 1.442695
        %v861 = vpow.pop %v860
        %v862 = vmul.f32 %v859, 1.442695
        %v863 = vpow.pop %v862
        %v864 = vsel %vm697, %v861, 0.0
        %865 = vadd.xlane.f32.xlu0 %v864
        %v866 = vpop.xlane.xlu0 %865
        %v867 = vsel %vm697, %v863, 0.0
        %868 = vadd.xlane.f32.xlu0 %v867
        %v869 = vpop.xlane.xlu0 %868
        %v870 = vpack.c.bf16 %v861, %v861
        %v871 = vpack.c.bf16 %v863, %v863
        %v873 = vunpack.c.l.b16 %v690
        %v874 = vpack.c.b16 %v873, %v873
        %875 = vrot.lane.b32.xlu0 %v874, 120
        %v876 = vpop.permute.xlu0 %875
        %v878 = vsel %vm697, %v870, 0
        %v881 = vsel %vm764, %v876, 0
        %883 = vmatpush.bf16.msra.mxu0 0
        %884 = vmatpush.bf16.msra.mxu0 0
        %885 = vmatpush.bf16.msra.mxu0 0
        %886 = vmatpush.bf16.msra.mxu0 0
        %887 = vmatpush.bf16.msra.mxu0 0
        %888 = vmatpush.bf16.msra.mxu0 0
        %889 = vmatpush.bf16.msra.mxu0 0
        %890 = vmatpush.bf16.msra.mxu0 %v881
        %891 = vmatmul.bf16.gmra.mxu0 %v878
        %v892 = vpop.f32.mrf.mxu0
        %v893 = vadd.f32 0.0, %v892
        %v894 = vpop.f32.mrf.mxu0
        %895 = vdwg.mxu0
        %v897 = vunpack.c.l.b16 %v691
        %v898 = vpack.c.b16 %v897, %v897
        %899 = vrot.lane.b32.xlu0 %v898, 120
        %v900 = vpop.permute.xlu0 %899
        %v902 = vsel %vm697, %v871, 0
        %v905 = vsel %vm764, %v900, 0
        %907 = vmatpush.bf16.msra.mxu0 0
        %908 = vmatpush.bf16.msra.mxu0 0
        %909 = vmatpush.bf16.msra.mxu0 0
        %910 = vmatpush.bf16.msra.mxu0 0
        %911 = vmatpush.bf16.msra.mxu0 0
        %912 = vmatpush.bf16.msra.mxu0 0
        %913 = vmatpush.bf16.msra.mxu0 0
        %914 = vmatpush.bf16.msra.mxu0 %v905
        %915 = vmatmul.bf16.gmra.mxu0 %v902
        %v916 = vpop.f32.mrf.mxu0
        %v917 = vadd.f32 0.0, %v916
        %v918 = vpop.f32.mrf.mxu0
        %919 = vdwg.mxu0
        %v920 = vrcp.pop %v866
        %v921 = vrcp.pop %v869
        %v922 = vmul.f32 %v893, %v920
        %v923 = vmul.f32 %v917, %v921
        %926 = vrot.lane.b32.xlu0 %v922, 8
        %v927 = vpop.permute.xlu0 %926
        %928 = vrot.lane.b32.xlu0 %v923, 8
        %v929 = vpop.permute.xlu0 %928
        %vm932 = vcmask 130112
        %933 = vst.msk [vmem:[#allocation3] sm:$0xff] %vm932, %v927
        %934 = vst.msk [vmem:[#allocation3 + $0x8] sm:$0xff] %vm932, %v929
        %935 = vrot.lane.b32.xlu0 %v694, 112
        %v936 = vpop.permute.xlu0 %935
        %937 = vrot.lane.b32.xlu0 %v694, 80
        %v938 = vpop.permute.xlu0 %937
        %v940 = vsel %vm697, %v936, 0
        %v943 = vsel %vm697, %v938, 0
        %945 = vmatpush.bf16.xpose.msra.mxu0 0
        %946 = vmatpush.bf16.xpose.msra.mxu0 0
        %947 = vmatpush.bf16.xpose.msra.mxu0 0
        %948 = vmatpush.bf16.xpose.msra.mxu0 0
        %949 = vmatpush.bf16.xpose.msra.mxu0 0
        %950 = vmatpush.bf16.xpose.msra.mxu0 0
        %951 = vmatpush.bf16.xpose.msra.mxu0 0
        %952 = vmatpush.bf16.xpose.msra.mxu0 %v943
        %953 = vmatmul.bf16.gmra.mxu0 %v940
        %v954 = vpop.f32.mrf.mxu0
        %v955 = vadd.f32 0.0, %v954
        %v956 = vpop.f32.mrf.mxu0
        %957 = vdwg.mxu0
        %958 = vrot.lane.b32.xlu0 %v719, 112
        %v959 = vpop.permute.xlu0 %958
        %960 = vrot.lane.b32.xlu0 %v719, 80
        %v961 = vpop.permute.xlu0 %960
        %v963 = vsel %vm697, %v959, 0
        %v966 = vsel %vm697, %v961, 0
        %968 = vmatpush.bf16.xpose.msra.mxu0 0
        %969 = vmatpush.bf16.xpose.msra.mxu0 0
        %970 = vmatpush.bf16.xpose.msra.mxu0 0
        %971 = vmatpush.bf16.xpose.msra.mxu0 0
        %972 = vmatpush.bf16.xpose.msra.mxu0 0
        %973 = vmatpush.bf16.xpose.msra.mxu0 0
        %974 = vmatpush.bf16.xpose.msra.mxu0 0
        %975 = vmatpush.bf16.xpose.msra.mxu0 %v966
        %976 = vmatmul.bf16.gmra.mxu0 %v963
        %v977 = vpop.f32.mrf.mxu0
        %v978 = vadd.f32 0.0, %v977
        %v979 = vpop.f32.mrf.mxu0
        %980 = vdwg.mxu0
        %v981 = vsel %vm697, %v955, -inf
        %982 = vmax.xlane.f32.xlu0 %v981
        %v983 = vpop.xlane.xlu0 %982
        %v984 = vsel %vm697, %v978, -inf
        %985 = vmax.xlane.f32.xlu0 %v984
        %v986 = vpop.xlane.xlu0 %985
        %v987 = vsub.f32 %v955, %v983
        %v988 = vsub.f32 %v978, %v986
        %v989 = vmul.f32 %v987, 1.442695
        %v990 = vpow.pop %v989
        %v991 = vmul.f32 %v988, 1.442695
        %v992 = vpow.pop %v991
        %v993 = vsel %vm697, %v990, 0.0
        %994 = vadd.xlane.f32.xlu0 %v993
        %v995 = vpop.xlane.xlu0 %994
        %v996 = vsel %vm697, %v992, 0.0
        %997 = vadd.xlane.f32.xlu0 %v996
        %v998 = vpop.xlane.xlu0 %997
        %v999 = vpack.c.bf16 %v990, %v990
        %v1000 = vpack.c.bf16 %v992, %v992
        %1001 = vrot.lane.b32.xlu0 %v874, 112
        %v1002 = vpop.permute.xlu0 %1001
        %v1004 = vsel %vm697, %v999, 0
        %v1007 = vsel %vm764, %v1002, 0
        %1009 = vmatpush.bf16.msra.mxu0 0
        %1010 = vmatpush.bf16.msra.mxu0 0
        %1011 = vmatpush.bf16.msra.mxu0 0
        %1012 = vmatpush.bf16.msra.mxu0 0
        %1013 = vmatpush.bf16.msra.mxu0 0
        %1014 = vmatpush.bf16.msra.mxu0 0
        %1015 = vmatpush.bf16.msra.mxu0 0
        %1016 = vmatpush.bf16.msra.mxu0 %v1007
        %1017 = vmatmul.bf16.gmra.mxu0 %v1004
        %v1018 = vpop.f32.mrf.mxu0
        %v1019 = vadd.f32 0.0, %v1018
        %v1020 = vpop.f32.mrf.mxu0
        %1021 = vdwg.mxu0
        %1022 = vrot.lane.b32.xlu0 %v898, 112
        %v1023 = vpop.permute.xlu0 %1022
        %v1025 = vsel %vm697, %v1000, 0
        %v1028 = vsel %vm764, %v1023, 0
        %1030 = vmatpush.bf16.msra.mxu0 0
        %1031 = vmatpush.bf16.msra.mxu0 0
        %1032 = vmatpush.bf16.msra.mxu0 0
        %1033 = vmatpush.bf16.msra.mxu0 0
        %1034 = vmatpush.bf16.msra.mxu0 0
        %1035 = vmatpush.bf16.msra.mxu0 0
        %1036 = vmatpush.bf16.msra.mxu0 0
        %1037 = vmatpush.bf16.msra.mxu0 %v1028
        %1038 = vmatmul.bf16.gmra.mxu0 %v1025
        %v1039 = vpop.f32.mrf.mxu0
        %v1040 = vadd.f32 0.0, %v1039
        %v1041 = vpop.f32.mrf.mxu0
        %1042 = vdwg.mxu0
        %v1043 = vrcp.pop %v995
        %v1044 = vrcp.pop %v998
        %v1045 = vmul.f32 %v1019, %v1043
        %v1046 = vmul.f32 %v1040, %v1044
        %1049 = vrot.lane.b32.xlu0 %v1045, 16
        %v1050 = vpop.permute.xlu0 %1049
        %1051 = vrot.lane.b32.xlu0 %v1046, 16
        %v1052 = vpop.permute.xlu0 %1051
        %vm1055 = vcmask 195712
        %1056 = vst.msk [vmem:[#allocation3] sm:$0xff] %vm1055, %v1050
        %1057 = vst.msk [vmem:[#allocation3 + $0x8] sm:$0xff] %vm1055, %v1052
        %1058 = vrot.lane.b32.xlu0 %v694, 104
        %v1059 = vpop.permute.xlu0 %1058
        %1060 = vrot.lane.b32.xlu0 %v694, 72
        %v1061 = vpop.permute.xlu0 %1060
        %v1063 = vsel %vm697, %v1059, 0
        %v1066 = vsel %vm697, %v1061, 0
        %1068 = vmatpush.bf16.xpose.msra.mxu0 0
        %1069 = vmatpush.bf16.xpose.msra.mxu0 0
        %1070 = vmatpush.bf16.xpose.msra.mxu0 0
        %1071 = vmatpush.bf16.xpose.msra.mxu0 0
        %1072 = vmatpush.bf16.xpose.msra.mxu0 0
        %1073 = vmatpush.bf16.xpose.msra.mxu0 0
        %1074 = vmatpush.bf16.xpose.msra.mxu0 0
        %1075 = vmatpush.bf16.xpose.msra.mxu0 %v1066
        %1076 = vmatmul.bf16.gmra.mxu0 %v1063
        %v1077 = vpop.f32.mrf.mxu0
        %v1078 = vadd.f32 0.0, %v1077
        %v1079 = vpop.f32.mrf.mxu0
        %1080 = vdwg.mxu0
        %1081 = vrot.lane.b32.xlu0 %v719, 104
        %v1082 = vpop.permute.xlu0 %1081
        %1083 = vrot.lane.b32.xlu0 %v719, 72
        %v1084 = vpop.permute.xlu0 %1083
        %v1086 = vsel %vm697, %v1082, 0
        %v1089 = vsel %vm697, %v1084, 0
        %1091 = vmatpush.bf16.xpose.msra.mxu0 0
        %1092 = vmatpush.bf16.xpose.msra.mxu0 0
        %1093 = vmatpush.bf16.xpose.msra.mxu0 0
        %1094 = vmatpush.bf16.xpose.msra.mxu0 0
        %1095 = vmatpush.bf16.xpose.msra.mxu0 0
        %1096 = vmatpush.bf16.xpose.msra.mxu0 0
        %1097 = vmatpush.bf16.xpose.msra.mxu0 0
        %1098 = vmatpush.bf16.xpose.msra.mxu0 %v1089
        %1099 = vmatmul.bf16.gmra.mxu0 %v1086
        %v1100 = vpop.f32.mrf.mxu0
        %v1101 = vadd.f32 0.0, %v1100
        %v1102 = vpop.f32.mrf.mxu0
        %1103 = vdwg.mxu0
        %v1104 = vsel %vm697, %v1078, -inf
        %1105 = vmax.xlane.f32.xlu0 %v1104
        %v1106 = vpop.xlane.xlu0 %1105
        %v1107 = vsel %vm697, %v1101, -inf
        %1108 = vmax.xlane.f32.xlu0 %v1107
        %v1109 = vpop.xlane.xlu0 %1108
        %v1110 = vsub.f32 %v1078, %v1106
        %v1111 = vsub.f32 %v1101, %v1109
        %v1112 = vmul.f32 %v1110, 1.442695
        %v1113 = vpow.pop %v1112
        %v1114 = vmul.f32 %v1111, 1.442695
        %v1115 = vpow.pop %v1114
        %v1116 = vsel %vm697, %v1113, 0.0
        %1117 = vadd.xlane.f32.xlu0 %v1116
        %v1118 = vpop.xlane.xlu0 %1117
        %v1119 = vsel %vm697, %v1115, 0.0
        %1120 = vadd.xlane.f32.xlu0 %v1119
        %v1121 = vpop.xlane.xlu0 %1120
        %v1122 = vpack.c.bf16 %v1113, %v1113
        %v1123 = vpack.c.bf16 %v1115, %v1115
        %1124 = vrot.lane.b32.xlu0 %v874, 104
        %v1125 = vpop.permute.xlu0 %1124
        %v1127 = vsel %vm697, %v1122, 0
        %v1130 = vsel %vm764, %v1125, 0
        %1132 = vmatpush.bf16.msra.mxu0 0
        %1133 = vmatpush.bf16.msra.mxu0 0
        %1134 = vmatpush.bf16.msra.mxu0 0
        %1135 = vmatpush.bf16.msra.mxu0 0
        %1136 = vmatpush.bf16.msra.mxu0 0
        %1137 = vmatpush.bf16.msra.mxu0 0
        %1138 = vmatpush.bf16.msra.mxu0 0
        %1139 = vmatpush.bf16.msra.mxu0 %v1130
        %1140 = vmatmul.bf16.gmra.mxu0 %v1127
        %v1141 = vpop.f32.mrf.mxu0
        %v1142 = vadd.f32 0.0, %v1141
        %v1143 = vpop.f32.mrf.mxu0
        %1144 = vdwg.mxu0
        %1145 = vrot.lane.b32.xlu0 %v898, 104
        %v1146 = vpop.permute.xlu0 %1145
        %v1148 = vsel %vm697, %v1123, 0
        %v1151 = vsel %vm764, %v1146, 0
        %1153 = vmatpush.bf16.msra.mxu0 0
        %1154 = vmatpush.bf16.msra.mxu0 0
        %1155 = vmatpush.bf16.msra.mxu0 0
        %1156 = vmatpush.bf16.msra.mxu0 0
        %1157 = vmatpush.bf16.msra.mxu0 0
        %1158 = vmatpush.bf16.msra.mxu0 0
        %1159 = vmatpush.bf16.msra.mxu0 0
        %1160 = vmatpush.bf16.msra.mxu0 %v1151
        %1161 = vmatmul.bf16.gmra.mxu0 %v1148
        %v1162 = vpop.f32.mrf.mxu0
        %v1163 = vadd.f32 0.0, %v1162
        %v1164 = vpop.f32.mrf.mxu0
        %1165 = vdwg.mxu0
        %v1166 = vrcp.pop %v1118
        %v1167 = vrcp.pop %v1121
        %v1168 = vmul.f32 %v1142, %v1166
        %v1169 = vmul.f32 %v1163, %v1167
        %1172 = vrot.lane.b32.xlu0 %v1168, 24
        %v1173 = vpop.permute.xlu0 %1172
        %1174 = vrot.lane.b32.xlu0 %v1169, 24
        %v1175 = vpop.permute.xlu0 %1174
        %vm1178 = vcmask 261312
        %1179 = vst.msk [vmem:[#allocation3] sm:$0xff] %vm1178, %v1173
        %1180 = vst.msk [vmem:[#allocation3 + $0x8] sm:$0xff] %vm1178, %v1175
        %v1181 = vld [vmem:[#allocation3] sm:$0xff]
        %v1182 = vld [vmem:[#allocation3 + $0x8] sm:$0xff]
        %v1183 = vpack.c.bf16 %v1182, %v1181
        %v1184 = vld [vmem:[%s587] sm:$0xf]
        %v1185 = vld [vmem:[%s587 + $0x4] sm:$0xf]
        %v1186 = vld [vmem:[%s587 + $0x8] sm:$0xf]
        %v1187 = vld [vmem:[%s587 + $0xc] sm:$0xf]
        %v1188 = vperm.slane %v611, 1
        %v1193 = vunpack.c.l.b16 %v1184
        %v1194 = vunpack.c.l.b16 %v1185
        %v1195 = vunpack.c.l.b16 %v1186
        %v1196 = vunpack.c.l.b16 %v1187
        %v1197 = vpack.c.b16 %v1194, %v1193
        %v1198 = vpack.c.b16 %v1196, %v1195
        %v1202 = vsel %vm636, %v1183, 0
        %1204 = vmatpush.bf16.msra.mxu0 0
        %1205 = vmatpush.bf16.msra.mxu0 0
        %1206 = vmatpush.bf16.msra.mxu0 0
        %1207 = vmatpush.bf16.msra.mxu0 0
        %1208 = vmatpush.bf16.msra.mxu0 0
        %1209 = vmatpush.bf16.msra.mxu0 0
        %1210 = vmatpush.bf16.msra.mxu0 %v1198
        %1211 = vmatpush.bf16.msra.mxu0 %v1197
        %1212 = vmatmul.bf16.gmra.mxu0 %v1202
        %v1213 = vpop.f32.mrf.mxu0
        %v1214 = vadd.f32 %v1188, %v1213
        %v1215 = vpop.f32.mrf.mxu0
        %v1216 = vadd.f32 %v1188, %v1215
        %1217 = vdwg.mxu0
        %v1218 = vadd.f32 %v607, %v1214
        %v1219 = vadd.f32 %v608, %v1216
        %v1220 = vsel %vm636, %v1218, 0.0
        %1221 = vadd.xlane.f32.xlu0 %v1220
        %v1222 = vpop.xlane.xlu0 %1221
        %v1223 = vsel %vm636, %v1219, 0.0
        %1224 = vadd.xlane.f32.xlu0 %v1223
        %v1225 = vpop.xlane.xlu0 %1224
        %v1226 = vrcp.pop 32.0
        %v1227 = vmul.f32 32.0, %v1226
        %v1228 = vsub.f32 1.0, %v1227
        %v1229 = vmul.f32 %v1226, %v1228
        %v1230 = vadd.f32 %v1226, %v1229
        %vm1231 = vweird.f32 %v1226
        %v1232 = vsel %vm1231, %v1226, %v1230
        %v1233 = vmul.f32 %v1222, %v1232
        %v1234 = vmul.f32 %v1225, %v1232
        %v1235 = vsub.f32 %v1218, %v1233
        %v1236 = vsub.f32 %v1219, %v1234
        %v1237 = vmul.f32 %v1235, %v1235
        %v1238 = vmul.f32 %v1236, %v1236
        %v1239 = vsel %vm636, %v1237, 0.0
        %1240 = vadd.xlane.f32.xlu0 %v1239
        %v1241 = vpop.xlane.xlu0 %1240
        %v1242 = vsel %vm636, %v1238, 0.0
        %1243 = vadd.xlane.f32.xlu0 %v1242
        %v1244 = vpop.xlane.xlu0 %1243
        %v1245 = vmul.f32 %v1241, %v1232
        %v1246 = vmul.f32 %v1244, %v1232
        %v1247 = vadd.f32 %v1245, 1e-05
        %v1248 = vadd.f32 %v1246, 1e-05
        %v1249 = vrsqrt.pop %v1247
        %v1250 = vmul.f32 %v1249, %v1247
        %v1251 = vmul.f32 %v1250, %v1249
        %v1252 = vmul.f32 0.5, %v1251
        %v1253 = vsub.f32 1.5, %v1252
        %v1254 = vmul.f32 %v1249, %v1253
        %vm1255 = vweird.f32 %v1247
        %vm1256 = vweird.f32 %v1249
        %vm1257 = vmor %vm1255, %vm1256
        %v1258 = vsel %vm1257, %v1249, %v1254
        %v1259 = vrsqrt.pop %v1248
        %v1260 = vmul.f32 %v1259, %v1248
        %v1261 = vmul.f32 %v1260, %v1259
        %v1262 = vmul.f32 0.5, %v1261
        %v1263 = vsub.f32 1.5, %v1262
        %v1264 = vmul.f32 %v1259, %v1263
        %vm1265 = vweird.f32 %v1248
        %vm1266 = vweird.f32 %v1259
        %vm1267 = vmor %vm1265, %vm1266
        %v1268 = vsel %vm1267, %v1259, %v1264
        %v1269 = vmul.f32 %v1235, %v1258
        %v1270 = vmul.f32 %v1236, %v1268
        %v1271 = vperm.slane %v611, 2
        %v1272 = vmul.f32 %v1269, %v1271
        %v1273 = vmul.f32 %v1270, %v1271
        %v1274 = vperm.slane %v611, 3
        %v1275 = vadd.f32 %v1272, %v1274
        %v1276 = vadd.f32 %v1273, %v1274
        %v1277 = vpack.c.bf16 %v1276, %v1275
        %v1278 = vld [vmem:[%s496] sm:$0xf]
        %v1279 = vld [vmem:[%s496 + $0x4] sm:$0xf]
        %v1280 = vld [vmem:[%s496 + $0x8] sm:$0xf]
        %v1281 = vld [vmem:[%s496 + $0xc] sm:$0xf]
        %v1282 = vld [vmem:[%s590] sm:$0x1]
        %v1284 = vperm.slane %v1282, 0
        %v1290 = vunpack.c.l.b16 %v1278
        %v1291 = vunpack.c.l.b16 %v1279
        %v1292 = vunpack.c.l.b16 %v1280
        %v1293 = vunpack.c.l.b16 %v1281
        %v1294 = vpack.c.b16 %v1291, %v1290
        %v1295 = vpack.c.b16 %v1293, %v1292
        %v1299 = vsel %vm636, %v1277, 0
        %1301 = vmatpush.bf16.msra.mxu0 0
        %1302 = vmatpush.bf16.msra.mxu0 0
        %1303 = vmatpush.bf16.msra.mxu0 0
        %1304 = vmatpush.bf16.msra.mxu0 0
        %1305 = vmatpush.bf16.msra.mxu0 0
        %1306 = vmatpush.bf16.msra.mxu0 0
        %1307 = vmatpush.bf16.msra.mxu0 %v1295
        %1308 = vmatpush.bf16.msra.mxu0 %v1294
        %1309 = vmatmul.bf16.gmra.mxu0 %v1299
        %v1310 = vpop.f32.mrf.mxu0
        %v1311 = vadd.f32 %v1284, %v1310
        %v1312 = vpop.f32.mrf.mxu0
        %v1313 = vadd.f32 %v1284, %v1312
        %1314 = vdwg.mxu0
        %v1315 = vmax.f32 %v1311, 0.0
        %v1316 = vmax.f32 %v1313, 0.0
        %v1317 = vpack.c.bf16 %v1316, %v1315
        %v1318 = vld [vmem:[%s595] sm:$0xf]
        %v1319 = vld [vmem:[%s595 + $0x4] sm:$0xf]
        %v1320 = vld [vmem:[%s595 + $0x8] sm:$0xf]
        %v1321 = vld [vmem:[%s595 + $0xc] sm:$0xf]
        %v1322 = vld [vmem:[%s595 + $0x10] sm:$0xf]
        %v1323 = vld [vmem:[%s595 + $0x14] sm:$0xf]
        %v1324 = vld [vmem:[%s595 + $0x18] sm:$0xf]
        %v1325 = vld [vmem:[%s595 + $0x1c] sm:$0xf]
        %v1326 = vperm.slane %v611, 6
        %v1335 = vunpack.c.l.b16 %v1318
        %v1336 = vunpack.c.l.b16 %v1319
        %v1337 = vunpack.c.l.b16 %v1320
        %v1338 = vunpack.c.l.b16 %v1321
        %v1339 = vunpack.c.l.b16 %v1322
        %v1340 = vunpack.c.l.b16 %v1323
        %v1341 = vunpack.c.l.b16 %v1324
        %v1342 = vunpack.c.l.b16 %v1325
        %v1343 = vpack.c.b16 %v1336, %v1335
        %v1344 = vpack.c.b16 %v1338, %v1337
        %v1345 = vpack.c.b16 %v1340, %v1339
        %v1346 = vpack.c.b16 %v1342, %v1341
        %vm1351 = vcmask 523264
        %v1353 = vsel %vm1351, %v1317, 0
        %1355 = vmatpush.bf16.msra.mxu0 0
        %1356 = vmatpush.bf16.msra.mxu0 0
        %1357 = vmatpush.bf16.msra.mxu0 0
        %1358 = vmatpush.bf16.msra.mxu0 0
        %1359 = vmatpush.bf16.msra.mxu0 %v1346
        %1360 = vmatpush.bf16.msra.mxu0 %v1345
        %1361 = vmatpush.bf16.msra.mxu0 %v1344
        %1362 = vmatpush.bf16.msra.mxu0 %v1343
        %1363 = vmatmul.bf16.gmra.mxu0 %v1353
        %v1364 = vpop.f32.mrf.mxu0
        %v1365 = vadd.f32 %v1326, %v1364
        %v1366 = vpop.f32.mrf.mxu0
        %v1367 = vadd.f32 %v1326, %v1366
        %1368 = vdwg.mxu0
        %v1369 = vadd.f32 %v1275, %v1365
        %v1370 = vadd.f32 %v1276, %v1367
        %v1371 = vsel %vm636, %v1369, 0.0
        %1372 = vadd.xlane.f32.xlu0 %v1371
        %v1373 = vpop.xlane.xlu0 %1372
        %v1374 = vsel %vm636, %v1370, 0.0
        %1375 = vadd.xlane.f32.xlu0 %v1374
        %v1376 = vpop.xlane.xlu0 %1375
        %v1377 = vmul.f32 %v1373, %v1232
        %v1378 = vmul.f32 %v1376, %v1232
        %v1379 = vsub.f32 %v1369, %v1377
        %v1380 = vsub.f32 %v1370, %v1378
        %v1381 = vmul.f32 %v1379, %v1379
        %v1382 = vmul.f32 %v1380, %v1380
        %v1383 = vsel %vm636, %v1381, 0.0
        %1384 = vadd.xlane.f32.xlu0 %v1383
        %v1385 = vpop.xlane.xlu0 %1384
        %v1386 = vsel %vm636, %v1382, 0.0
        %1387 = vadd.xlane.f32.xlu0 %v1386
        %v1388 = vpop.xlane.xlu0 %1387
        %v1389 = vmul.f32 %v1385, %v1232
        %v1390 = vmul.f32 %v1388, %v1232
        %v1391 = vadd.f32 %v1389, 1e-05
        %v1392 = vadd.f32 %v1390, 1e-05
        %v1393 = vrsqrt.pop %v1391
        %v1394 = vmul.f32 %v1393, %v1391
        %v1395 = vmul.f32 %v1394, %v1393
        %v1396 = vmul.f32 0.5, %v1395
        %v1397 = vsub.f32 1.5, %v1396
        %v1398 = vmul.f32 %v1393, %v1397
        %vm1399 = vweird.f32 %v1391
        %vm1400 = vweird.f32 %v1393
        %vm1401 = vmor %vm1399, %vm1400
        %v1402 = vsel %vm1401, %v1393, %v1398
        %v1403 = vrsqrt.pop %v1392
        %v1404 = vmul.f32 %v1403, %v1392
        %v1405 = vmul.f32 %v1404, %v1403
        %v1406 = vmul.f32 0.5, %v1405
        %v1407 = vsub.f32 1.5, %v1406
        %v1408 = vmul.f32 %v1403, %v1407
        %vm1409 = vweird.f32 %v1392
        %vm1410 = vweird.f32 %v1403
        %vm1411 = vmor %vm1409, %vm1410
        %v1412 = vsel %vm1411, %v1403, %v1408
        %v1413 = vmul.f32 %v1379, %v1402
        %v1414 = vmul.f32 %v1380, %v1412
        %v1415 = vperm.slane %v611, 4
        %v1416 = vmul.f32 %v1413, %v1415
        %v1417 = vmul.f32 %v1414, %v1415
        %v1418 = vperm.slane %v611, 5
        %v1419 = vadd.f32 %v1416, %v1418
        %v1420 = vadd.f32 %v1417, %v1418
        %1421 = vst.msk [vmem:[#allocation2] sm:$0xff] %vm636, %v1419
        %1422 = vst.msk [vmem:[#allocation2 + $0x8] sm:$0xff] %vm636, %v1420
        %p1423 = scmp.eq.s32.totalorder %s29, 1
        // Predicated region
        $region85: #{tpu_custom_call.1} parent=59 // pred_check
          %p1424 = pneg %p1423
        $region86: #{tpu_custom_call.1} parent=59 // pred_check_branch
          %1426 = sbr.rel (%p1424) target = $region88
        $region87: #{tpu_custom_call.1} parent=59 // pred_region
          %1427 = vst.msk [vmem:[#allocation12] sm:$0xff] %vm636, %v1419
          %1428 = vst.msk [vmem:[#allocation12 + $0x8] sm:$0xff] %vm636, %v1420
        $region88: #{tpu_custom_call.1} parent=59 // pred_fallthru
          _
        // Predicated region
        $region89: #{tpu_custom_call.1} parent=59 // pred_check
          %p1429 = pneg %p314
        $region90: #{tpu_custom_call.1} parent=59 // pred_check_branch
          %1431 = sbr.rel (%p1429) target = $region92
        $region91: #{tpu_custom_call.1} parent=59 // pred_region
          %s1432 = smul.u32 2, %s28
          %1434 = vsyncadd [#allocation6], 0
          %s1435 = smul.addr %s1432, 8
          %s1436 = scalar_lea.hbm %s10, %s1435
          %s1437 = sshll.u32 [#allocation12], 4
          %s1438 = int_to_ptr.vmem [resolvable:$true] %s1437
          %s1439 = sshll.u32 %s1436, 4
          %s1440 = int_to_ptr.hbm [resolvable:$true] %s1439
          %1445 = dma.vmem_to_hbm [thread:$0]  %s1438, 256, %s1440, [#allocation6], 128, 128, 8
        $region92: #{tpu_custom_call.1} parent=59 // pred_fallthru
          _
        // Predicated region
        $region93: #{tpu_custom_call.1} parent=59 // pred_check
          %p1446 = pneg %p314
        $region94: #{tpu_custom_call.1} parent=59 // pred_check_branch
          %1448 = sbr.rel (%p1446) target = $region96
        $region95: #{tpu_custom_call.1} parent=59 // pred_region
          %1450 = dma.done [#allocation6], 256
        $region96: #{tpu_custom_call.1} parent=59 // pred_fallthru
          _
      $region60: #{tpu_custom_call.1} parent=5 // pred_fallthru
        _
      %p1451 = scmp.le.s32.totalorder 2, %s19
      // Predicated region
      $region97: #{tpu_custom_call.1} parent=5 // pred_check
        %p1452 = pneg %p1451
      $region98: #{tpu_custom_call.1} parent=5 // pred_check_branch
        %1454 = sbr.rel (%p1452) target = $region100
      $region99: #{tpu_custom_call.1} parent=5 // pred_region
        %s1455 = ssub.s32 %s19, 2
      $region100: #{tpu_custom_call.1} parent=5 // pred_fallthru
        _
    $region6: #{tpu_custom_call.1} parent=1 // loop_footer
      %s23 = sadd.s32 1, %s19
    $region7: #{tpu_custom_call.1} parent=1 // loop_footer_branch
      %18 = sbr.rel target = $region3
    $region8: #{tpu_custom_call.1} parent=1 // loop_exit
      _
    %1456 = vsyncpa [#allocation5], 1
    %s1457 = scalar_lea.sflag [#allocation5], 1
    %1458 = vsyncpa %s1457, 1
    %1459 = vsyncpa [#allocation8], 1
    %1460 = vsyncpa [#allocation6], 1
    %s1461 = scalar_lea.sflag [#allocation6], 1
    %1462 = vsyncpa %s1461, 1

</llo_original>
